<compile_context>
chip_gen: v5e
topology: v5e:2x2
jax: 0.10.0
libtpu: 0.0.40
codegen_flags: <defaults>
</compile_context>

<pallas_src>
import functools

import jax
import jax.numpy as jnp
import numpy as np
from jax.experimental import pallas as pl
from jax.experimental.pallas import tpu as pltpu


def _conv_stats_kernel(x_ref, w_ref, b_ref, y_ref, sum_ref, ssq_ref, *, H, W):
    """3x3 "same" conv via a single im2col MXU matmul + bias + per-channel stats.

    x_ref  : (1, H, W, Cin)   bf16   unpadded input (halo handled in-kernel)
    w_ref  : (9*Cin, Cout)    bf16   tap-major reshape of the HWIO weights
    b_ref  : (1, Cout)        f32
    y_ref  : (1, Cout, H*W)   bf16   conv+bias, NCHW-flat, lane-dense
    sum_ref/ssq_ref : (1, 1, Cout) f32  per-image BatchNorm partial reductions
    """
    x = x_ref[0]                                        # (H, W, Cin) bf16
    cin = x.shape[-1]

    # Zero-pad the 1-pixel halo in registers (no HBM pad pass / no odd HBM block).
    zrow = jnp.zeros((1, W, cin), x.dtype)
    zcol = jnp.zeros((H + 2, 1, cin), x.dtype)
    xp = jnp.concatenate([zrow, x, zrow], axis=0)       # (H+2, W,   Cin)
    xp = jnp.concatenate([zcol, xp, zcol], axis=1)      # (H+2, W+2, Cin)

    # im2col: concat the 9 shifted views on the channel axis -> K = 9*Cin.
    taps = [xp[dy:dy + H, dx:dx + W, :] for dy in range(3) for dx in range(3)]
    patches = jnp.concatenate(taps, axis=-1).reshape(H * W, 9 * cin)   # bf16

    # Single MXU matmul, f32 accumulate.
    acc = jnp.dot(patches, w_ref[...], preferred_element_type=jnp.float32)
    acc = acc + b_ref[...]                              # (H*W, Cout) f32

    # Per-image BatchNorm partial reductions, kept in f32.
    sum_ref[0] = jnp.sum(acc, axis=0, keepdims=True)
    ssq_ref[0] = jnp.sum(acc * acc, axis=0, keepdims=True)

    # Store transposed (Cout, H*W): lane-dense store, already NCHW-flat, bf16.
    y_ref[0] = jnp.transpose(acc).astype(y_ref.dtype)


def _bn_lrelu_kernel(y_ref, scale_ref, shift_ref, o_ref, *, slope):
    """Fused per-channel affine (folded BatchNorm) + LeakyReLU, lane-dense."""
    v = y_ref[0].astype(jnp.float32) * scale_ref[...] + shift_ref[...]   # (Cout, H*W)
    o_ref[0] = jnp.where(v > 0, v, slope * v)


def vgg_layer_forward(x_nchw, w_hwio, bias, gamma, beta, *, eps=1e-5, slope=0.2):
    """Matches PyTorch vgg_layer.forward (module in default training mode:
    BatchNorm uses biased batch statistics over (N, H, W))."""
    N, Cin, H, W = x_nchw.shape
    Cout = w_hwio.shape[-1]
    HW = H * W

    # NCHW -> NHWC once, in bf16 (halves the transpose traffic).
    # TODO(synk): keep the surrounding model NHWC end-to-end to drop this transpose.
    x_nhwc = jnp.transpose(x_nchw.astype(jnp.bfloat16), (0, 2, 3, 1))
    # (3,3,Cin,Cout) -> (9*Cin, Cout); (dy, dx, cin) row order matches the
    # in-kernel tap concatenation order.
    w2 = w_hwio.astype(jnp.bfloat16).reshape(9 * Cin, Cout)
    b2 = bias.astype(jnp.float32).reshape(1, Cout)

    conv_call = pl.pallas_call(
        functools.partial(_conv_stats_kernel, H=H, W=W),
        out_shape=(
            jax.ShapeDtypeStruct((N, Cout, HW), jnp.bfloat16),   # conv + bias
            jax.ShapeDtypeStruct((N, 1, Cout), jnp.float32),     # per-image sum
            jax.ShapeDtypeStruct((N, 1, Cout), jnp.float32),     # per-image sumsq
        ),
        grid_spec=pltpu.PrefetchScalarGridSpec(
            num_scalar_prefetch=0,
            grid=(N,),
            in_specs=[
                pl.BlockSpec((1, H, W, Cin), lambda b: (b, 0, 0, 0)),
                pl.BlockSpec((9 * Cin, Cout), lambda b: (0, 0)),   # resident weight
                pl.BlockSpec((1, Cout), lambda b: (0, 0)),
            ],
            out_specs=(
                pl.BlockSpec((1, Cout, HW), lambda b: (b, 0, 0)),
                pl.BlockSpec((1, 1, Cout), lambda b: (b, 0, 0)),
                pl.BlockSpec((1, 1, Cout), lambda b: (b, 0, 0)),
            ),
        ),
        # Per-image work is independent -> let v7x shard the batch axis over 2 TCs.
        compiler_params=pltpu.CompilerParams(
            dimension_semantics=("parallel",)),
        # TODO(synk): for production VGG shapes (e.g. 224x224x64) on v7x's 64 MiB
        # VMEM, tile into row strips (2-row halo) instead of whole images and raise
        # vmem_limit_bytes; whole-image blocks are fine at these small test shapes.
    )
    y, sums, ssqs = conv_call(x_nhwc, w2, b2)

    # Training-mode BatchNorm: combine the N tiny per-image stats (f32).
    # NOTE: E[x^2]-E[x]^2 in f32 is adequate here; clamp guards tiny negatives.
    count = float(N * H * W)
    mean = jnp.sum(sums, axis=(0, 1)) / count
    var = jnp.sum(ssqs, axis=(0, 1)) / count - mean * mean        # biased variance
    var = jnp.maximum(var, 0.0)
    scale = gamma.astype(jnp.float32) * jax.lax.rsqrt(var + eps)
    shift = beta.astype(jnp.float32) - mean * scale

    bn_call = pl.pallas_call(
        functools.partial(_bn_lrelu_kernel, slope=slope),
        out_shape=jax.ShapeDtypeStruct((N, Cout, HW), jnp.float32),
        grid_spec=pltpu.PrefetchScalarGridSpec(
            num_scalar_prefetch=0,
            grid=(N,),
            in_specs=[
                pl.BlockSpec((1, Cout, HW), lambda b: (b, 0, 0)),
                pl.BlockSpec((Cout, 1), lambda b: (0, 0)),
                pl.BlockSpec((Cout, 1), lambda b: (0, 0)),
            ],
            out_specs=pl.BlockSpec((1, Cout, HW), lambda b: (b, 0, 0)),
        ),
        compiler_params=pltpu.CompilerParams(
            dimension_semantics=("parallel",)),
    )
    out_flat = bn_call(y, scale.reshape(Cout, 1), shift.reshape(Cout, 1))
    # Output is already in NCHW order; this reshape is free (no transpose).
    return out_flat.reshape(N, Cout, H, W)


def _reference(x_nchw, w_hwio, bias, gamma, beta, eps=1e-5, slope=0.2):
    """Plain-JAX f32 reference mirroring PyTorch semantics (sanity check)."""
    w_oihw = jnp.transpose(w_hwio, (3, 2, 0, 1))
    conv = jax.lax.conv_general_dilated(
        x_nchw, w_oihw, window_strides=(1, 1), padding=((1, 1), (1, 1)),
        dimension_numbers=("NCHW", "OIHW", "NCHW"))
    conv = conv + bias[None, :, None, None]
    mean = conv.mean(axis=(0, 2, 3))
    var = conv.var(axis=(0, 2, 3))
    xn = (conv - mean[None, :, None, None]) * jax.lax.rsqrt(var + eps)[None, :, None, None]
    out = xn * gamma[None, :, None, None] + beta[None, :, None, None]
    return jnp.where(out > 0, out, slope * out)


if __name__ == "__main__":
    # Small deterministic problem: vgg_layer(nin=4, nout=8) on (2, 4, 16, 16).
    N, Cin, Cout, H, W = 2, 4, 8, 16, 16
    key = jax.random.PRNGKey(0)
    kx, kw, kb, kg, kbt = jax.random.split(key, 5)

    x = jax.random.normal(kx, (N, Cin, H, W), dtype=jnp.float32)
    w_hwio = 0.1 * jax.random.normal(kw, (3, 3, Cin, Cout), dtype=jnp.float32)
    bias = 0.1 * jax.random.normal(kb, (Cout,), dtype=jnp.float32)
    gamma = 1.0 + 0.1 * jax.random.normal(kg, (Cout,), dtype=jnp.float32)
    beta = 0.1 * jax.random.normal(kbt, (Cout,), dtype=jnp.float32)

    out = jax.block_until_ready(vgg_layer_forward(x, w_hwio, bias, gamma, beta))
    ref = jax.block_until_ready(_reference(x, w_hwio, bias, gamma, beta))

    assert out.shape == (N, Cout, H, W), out.shape
    # bf16 MXU inputs (f32 accumulate) vs. pure-f32 reference -> bf16-level tolerance.
    np.testing.assert_allclose(np.asarray(out), np.asarray(ref),
                               rtol=2e-2, atol=2e-2)
    print("KERNEL_OK")
</pallas_src>

<mosaic_0001>
module attributes {stable_mosaic.version = 11 : i64} {
  func.func @_conv_stats_kernel(%arg0: i32, %arg1: memref<1x16x16x4xbf16, #tpu.memory_space<vmem>>, %arg2: memref<36x8xbf16, #tpu.memory_space<vmem>>, %arg3: memref<1x8xf32, #tpu.memory_space<vmem>>, %arg4: memref<1x8x256xbf16, #tpu.memory_space<vmem>>, %arg5: memref<1x1x8xf32, #tpu.memory_space<vmem>>, %arg6: memref<1x1x8xf32, #tpu.memory_space<vmem>>) attributes {dimension_semantics = [#tpu.dimension_semantics<parallel>], iteration_bounds = array<i64: 2>, scalar_prefetch = 0 : i64, scratch_operands = 0 : i64, tpu.core_type = #tpu.core_type<tc>, window_params = [{transform_indices = @transform_0, window_bounds = array<i64: 1, 16, 16, 4>}, {pipeline_mode = #tpu.pipeline_mode<synchronous>, transform_indices = @transform_1, window_bounds = array<i64: 36, 8>}, {pipeline_mode = #tpu.pipeline_mode<synchronous>, transform_indices = @transform_2, window_bounds = array<i64: 1, 8>}, {transform_indices = @transform_3, window_bounds = array<i64: 1, 8, 256>}, {transform_indices = @transform_4, window_bounds = array<i64: 1, 1, 8>}, {transform_indices = @transform_5, window_bounds = array<i64: 1, 1, 8>}]} {
    %c0 = arith.constant 0 : index
    %c0_0 = arith.constant 0 : index
    %c0_1 = arith.constant 0 : index
    %c0_2 = arith.constant 0 : index
    %0 = vector.load %arg1[%c0, %c0_0, %c0_1, %c0_2] : memref<1x16x16x4xbf16, #tpu.memory_space<vmem>>, vector<1x16x16x4xbf16>
    %1 = vector.shape_cast %0 : vector<1x16x16x4xbf16> to vector<16x16x4xbf16>
    %cst = arith.constant 0.000000e+00 : bf16
    %2 = vector.broadcast %cst : bf16 to vector<1x16x4xbf16>
    %cst_3 = arith.constant 0.000000e+00 : bf16
    %3 = vector.broadcast %cst_3 : bf16 to vector<18x1x4xbf16>
    %4 = tpu.concatenate %2, %1, %2 in 0 : vector<1x16x4xbf16>, vector<16x16x4xbf16>, vector<1x16x4xbf16> -> vector<18x16x4xbf16>
    %5 = tpu.concatenate %3, %4, %3 in 1 : vector<18x1x4xbf16>, vector<18x16x4xbf16>, vector<18x1x4xbf16> -> vector<18x18x4xbf16>
    %6 = vector.extract_strided_slice %5 {offsets = [0, 0, 0], sizes = [16, 16, 4], strides = [1, 1, 1]} : vector<18x18x4xbf16> to vector<16x16x4xbf16>
    %7 = vector.extract_strided_slice %5 {offsets = [0, 1, 0], sizes = [16, 16, 4], strides = [1, 1, 1]} : vector<18x18x4xbf16> to vector<16x16x4xbf16>
    %8 = vector.extract_strided_slice %5 {offsets = [0, 2, 0], sizes = [16, 16, 4], strides = [1, 1, 1]} : vector<18x18x4xbf16> to vector<16x16x4xbf16>
    %9 = vector.extract_strided_slice %5 {offsets = [1, 0, 0], sizes = [16, 16, 4], strides = [1, 1, 1]} : vector<18x18x4xbf16> to vector<16x16x4xbf16>
    %10 = vector.extract_strided_slice %5 {offsets = [1, 1, 0], sizes = [16, 16, 4], strides = [1, 1, 1]} : vector<18x18x4xbf16> to vector<16x16x4xbf16>
    %11 = vector.extract_strided_slice %5 {offsets = [1, 2, 0], sizes = [16, 16, 4], strides = [1, 1, 1]} : vector<18x18x4xbf16> to vector<16x16x4xbf16>
    %12 = vector.extract_strided_slice %5 {offsets = [2, 0, 0], sizes = [16, 16, 4], strides = [1, 1, 1]} : vector<18x18x4xbf16> to vector<16x16x4xbf16>
    %13 = vector.extract_strided_slice %5 {offsets = [2, 1, 0], sizes = [16, 16, 4], strides = [1, 1, 1]} : vector<18x18x4xbf16> to vector<16x16x4xbf16>
    %14 = vector.extract_strided_slice %5 {offsets = [2, 2, 0], sizes = [16, 16, 4], strides = [1, 1, 1]} : vector<18x18x4xbf16> to vector<16x16x4xbf16>
    %15 = tpu.concatenate %6, %7, %8, %9, %10, %11, %12, %13, %14 in 2 : vector<16x16x4xbf16>, vector<16x16x4xbf16>, vector<16x16x4xbf16>, vector<16x16x4xbf16>, vector<16x16x4xbf16>, vector<16x16x4xbf16>, vector<16x16x4xbf16>, vector<16x16x4xbf16>, vector<16x16x4xbf16> -> vector<16x16x36xbf16>
    %16 = vector.shape_cast %15 : vector<16x16x36xbf16> to vector<256x36xbf16>
    %c0_4 = arith.constant 0 : index
    %c0_5 = arith.constant 0 : index
    %17 = vector.load %arg2[%c0_4, %c0_5] : memref<36x8xbf16, #tpu.memory_space<vmem>>, vector<36x8xbf16>
    %cst_6 = arith.constant dense<0.000000e+00> : vector<256x8xf32>
    %18 = tpu.matmul %16, %17, %cst_6 {dimension_numbers = #tpu.dot_dimension_numbers<[1], [0], [0], [1], [0, 0, 1, 1], [], []>} : vector<256x36xbf16>, vector<36x8xbf16>, vector<256x8xf32> -> vector<256x8xf32>
    %c0_7 = arith.constant 0 : index
    %c0_8 = arith.constant 0 : index
    %19 = vector.load %arg3[%c0_7, %c0_8] : memref<1x8xf32, #tpu.memory_space<vmem>>, vector<1x8xf32>
    %20 = vector.broadcast %19 : vector<1x8xf32> to vector<256x8xf32>
    %21 = arith.addf %18, %20 : vector<256x8xf32>
    %cst_9 = arith.constant dense<0.000000e+00> : vector<8xf32>
    %22 = vector.multi_reduction <add>, %21, %cst_9 [0] : vector<256x8xf32> to vector<8xf32>
    %23 = vector.shape_cast %22 : vector<8xf32> to vector<1x8xf32>
    %c0_10 = arith.constant 0 : index
    %c0_11 = arith.constant 0 : index
    %c0_12 = arith.constant 0 : index
    %24 = vector.load %arg5[%c0_10, %c0_11, %c0_12] : memref<1x1x8xf32, #tpu.memory_space<vmem>>, vector<1x1x8xf32>
    %25 = vector.shape_cast %24 : vector<1x1x8xf32> to vector<1x8xf32>
    %26 = vector.shape_cast %23 : vector<1x8xf32> to vector<1x1x8xf32>
    tpu.vector_store %arg5[%c0_10, %c0_11, %c0_12], %26 {strides = array<i32>} : memref<1x1x8xf32, #tpu.memory_space<vmem>>, vector<1x1x8xf32>,
    %27 = arith.mulf %21, %21 : vector<256x8xf32>
    %cst_13 = arith.constant dense<0.000000e+00> : vector<8xf32>
    %28 = vector.multi_reduction <add>, %27, %cst_13 [0] : vector<256x8xf32> to vector<8xf32>
    %29 = vector.shape_cast %28 : vector<8xf32> to vector<1x8xf32>
    %c0_14 = arith.constant 0 : index
    %c0_15 = arith.constant 0 : index
    %c0_16 = arith.constant 0 : index
    %30 = vector.load %arg6[%c0_14, %c0_15, %c0_16] : memref<1x1x8xf32, #tpu.memory_space<vmem>>, vector<1x1x8xf32>
    %31 = vector.shape_cast %30 : vector<1x1x8xf32> to vector<1x8xf32>
    %32 = vector.shape_cast %29 : vector<1x8xf32> to vector<1x1x8xf32>
    tpu.vector_store %arg6[%c0_14, %c0_15, %c0_16], %32 {strides = array<i32>} : memref<1x1x8xf32, #tpu.memory_space<vmem>>, vector<1x1x8xf32>,
    %33 = tpu.transpose %21, [1, 0] : vector<256x8xf32> -> vector<8x256xf32>
    %34 = arith.truncf %33 : vector<8x256xf32> to vector<8x256xbf16>
    %c0_17 = arith.constant 0 : index
    %c0_18 = arith.constant 0 : index
    %c0_19 = arith.constant 0 : index
    %35 = vector.load %arg4[%c0_17, %c0_18, %c0_19] : memref<1x8x256xbf16, #tpu.memory_space<vmem>>, vector<1x8x256xbf16>
    %36 = vector.shape_cast %35 : vector<1x8x256xbf16> to vector<8x256xbf16>
    %37 = vector.shape_cast %34 : vector<8x256xbf16> to vector<1x8x256xbf16>
    tpu.vector_store %arg4[%c0_17, %c0_18, %c0_19], %37 {strides = array<i32>} : memref<1x8x256xbf16, #tpu.memory_space<vmem>>, vector<1x8x256xbf16>,
    return
  }
  func.func @transform_0(%arg0: i32) -> (i32, i32, i32, i32) {
    %c0_i32 = arith.constant 0 : i32
    %c0_i32_0 = arith.constant 0 : i32
    %c0_i32_1 = arith.constant 0 : i32
    %c0_i32_2 = arith.constant 0 : i32
    return %arg0, %c0_i32, %c0_i32_0, %c0_i32_1 : i32, i32, i32, i32
  }
  func.func @transform_1(%arg0: i32) -> (i32, i32) {
    %c0_i32 = arith.constant 0 : i32
    %c0_i32_0 = arith.constant 0 : i32
    %c0_i32_1 = arith.constant 0 : i32
    return %c0_i32, %c0_i32_0 : i32, i32
  }
  func.func @transform_2(%arg0: i32) -> (i32, i32) {
    %c0_i32 = arith.constant 0 : i32
    %c0_i32_0 = arith.constant 0 : i32
    %c0_i32_1 = arith.constant 0 : i32
    return %c0_i32, %c0_i32_0 : i32, i32
  }
  func.func @transform_3(%arg0: i32) -> (i32, i32, i32) {
    %c0_i32 = arith.constant 0 : i32
    %c0_i32_0 = arith.constant 0 : i32
    %c0_i32_1 = arith.constant 0 : i32
    return %arg0, %c0_i32, %c0_i32_0 : i32, i32, i32
  }
  func.func @transform_4(%arg0: i32) -> (i32, i32, i32) {
    %c0_i32 = arith.constant 0 : i32
    %c0_i32_0 = arith.constant 0 : i32
    %c0_i32_1 = arith.constant 0 : i32
    return %arg0, %c0_i32, %c0_i32_0 : i32, i32, i32
  }
  func.func @transform_5(%arg0: i32) -> (i32, i32, i32) {
    %c0_i32 = arith.constant 0 : i32
    %c0_i32_0 = arith.constant 0 : i32
    %c0_i32_1 = arith.constant 0 : i32
    return %arg0, %c0_i32, %c0_i32_0 : i32, i32, i32
  }
}

</mosaic_0001>

<llo_original>
// kernel: tpu_custom_call.1
$region0: #{tpu_custom_call.1}
  #allocation0 [shape = 'u32[]', space=smem, size = 0x4, offset = 0x4, fixed_abs, tag = 'smem constant byte address 0x4 - core index']
  #allocation1 [shape = 'u32[72,128]{1,0:T(1,128)}', space=vmem, size = 0x9000, scoped, tag = 'internal scratch']
  %s0 = inlined_call_operand.vmem [shape: bf16[2,16,16,4], index: 0, kind: input, shape index: {}]
  %s1 = inlined_call_operand.vmem [shape: bf16[36,8], index: 1, kind: input, shape index: {}]
  %s2 = inlined_call_operand.vmem [shape: f32[1,8], index: 2, kind: input, shape index: {}]
  %s3 = inlined_call_operand.hbm [shape: bf16[2,8,256], index: 3, kind: output, shape index: {0}]
  %s4 = inlined_call_operand.hbm [shape: f32[2,1,8], index: 4, kind: output, shape index: {1}]
  %s5 = inlined_call_operand.hbm [shape: f32[2,1,8], index: 5, kind: output, shape index: {2}]
  %6 = xla_tuple %s3, %s4, %s5
  %s7 = sld [smem:[#allocation0]]
  $region61: #{tpu_custom_call.1} parent=0
    _
  %s9 = ssub.s32 1, %s7
  %s10 = scalar_select 0, %s9, %s7
  $region1: #{tpu_custom_call.1} parent=0
    #allocation2 [shape = 'u8[8192]{0}', space=vmem, size = 0x2000, scoped, tag = 'output window, operand 0']
    #allocation3 [shape = 's32[2]{0}', space=sflag, size = 0x8, scoped, tag = 'scoped memory for tpu_custom_call.1']
    #allocation4 [shape = 'u8[1024]{0}', space=vmem, size = 0x400, scoped, tag = 'output window, operand 1']
    #allocation5 [shape = 's32[2]{0}', space=sflag, size = 0x8, scoped, tag = 'scoped memory for tpu_custom_call.1']
    #allocation6 [shape = 'u8[1024]{0}', space=vmem, size = 0x400, scoped, tag = 'output window, operand 2']
    %11 = vsyncpa [#allocation3], 0
    %s12 = scalar_lea.sflag [#allocation3], 1
    %13 = vsyncpa %s12, 0
    %14 = vsyncpa [#allocation5], 0
    %s15 = scalar_lea.sflag [#allocation5], 1
    %16 = vsyncpa %s15, 0
    loop: start=0, step=1, limit=4
    $region2: #{tpu_custom_call.1} parent=1 // loop_pre_header
      _
    $region3: #{tpu_custom_call.1} parent=1 // loop_header
      %s18 = sphi 0, %s22
      %p19 = scmp.ge.s32.totalorder %s18, 4
      %s28 = sphi 0, %s30
      %s31 = sphi 0, %s28
      %s32 = sphi 0, %s31
      %s48 = sphi 0, %s32
      %s52 = sphi 0, %s52
      %s54 = sphi 0, %s52
      %s55 = sphi 0, %s54
      %s69 = sphi 0, %s55
      %s73 = sphi 0, %s73
      %s75 = sphi 0, %s73
      %s76 = sphi 0, %s75
      %s90 = sphi 0, %s76
      %s96 = sphi 0, %s98
      %s99 = sphi 0, %s96
      %s100 = sphi 0, %s99
      %s116 = sphi 0, %s100
      %s122 = sphi 0, %s124
      %s125 = sphi 0, %s122
      %s126 = sphi 0, %s125
      %s142 = sphi 0, %s126
      %s148 = sphi 0, %s150
      %s151 = sphi 0, %s148
      %s152 = sphi 0, %s151
      %s168 = sphi 0, %s152
    $region4: #{tpu_custom_call.1} parent=1 // loop_header_branch
      %21 = sbr.rel (%p19) target = $region8
    $region5: #{tpu_custom_call.1} parent=1 // loop_body
      %s23 = ssub.s32 %s18, 1
      %s24 = ssub.s32 %s18, 2
      %s25 = sadd.s32 %s18, 1
      %s26 = ssub.s32 %s18, %s25
      %p27 = scmp.eq.s32.totalorder %s26, 0
      %s29 = sadd.s32 %s28, 1
      %s30 = scalar_select %p27, %s28, %s29
      %p33 = pneg %p27
      %p34 = scmp.eq.s32.totalorder %s18, 1
      %p35 = por %p33, %p34
      %p36 = scmp.ne.s32.totalorder %s28, %s31
      %p37 = scmp.eq.s32.totalorder %s18, 0
      %p38 = por %p36, %p37
      %p39 = scmp.ne.s32.totalorder %s28, %s31
      %p40 = scmp.eq.s32.totalorder %s23, 1
      %p41 = por %p39, %p40
      %p42 = scmp.ne.s32.totalorder %s31, %s32
      %p43 = scmp.eq.s32.totalorder %s23, 0
      %p44 = por %p42, %p43
      %p45 = scmp.ne.s32.totalorder %s31, %s32
      %p46 = scmp.eq.s32.totalorder %s24, 1
      %p47 = por %p45, %p46
      %p49 = scmp.ne.s32.totalorder %s32, %s48
      %p50 = scmp.eq.s32.totalorder %s24, 0
      %p51 = por %p49, %p50
      %s53 = sadd.s32 %s52, 1
      %p56 = scmp.eq.s32.totalorder %s18, 1
      %p57 = scmp.ne.s32.totalorder %s52, %s54
      %p58 = scmp.eq.s32.totalorder %s18, 0
      %p59 = por %p57, %p58
      %p60 = scmp.ne.s32.totalorder %s52, %s54
      %p61 = scmp.eq.s32.totalorder %s23, 1
      %p62 = por %p60, %p61
      %p63 = scmp.ne.s32.totalorder %s54, %s55
      %p64 = scmp.eq.s32.totalorder %s23, 0
      %p65 = por %p63, %p64
      %p66 = scmp.ne.s32.totalorder %s54, %s55
      %p67 = scmp.eq.s32.totalorder %s24, 1
      %p68 = por %p66, %p67
      %p70 = scmp.ne.s32.totalorder %s55, %s69
      %p71 = scmp.eq.s32.totalorder %s24, 0
      %p72 = por %p70, %p71
      %s74 = sadd.s32 %s73, 1
      %p77 = scmp.eq.s32.totalorder %s18, 1
      %p78 = scmp.ne.s32.totalorder %s73, %s75
      %p79 = scmp.eq.s32.totalorder %s18, 0
      %p80 = por %p78, %p79
      %p81 = scmp.ne.s32.totalorder %s73, %s75
      %p82 = scmp.eq.s32.totalorder %s23, 1
      %p83 = por %p81, %p82
      %p84 = scmp.ne.s32.totalorder %s75, %s76
      %p85 = scmp.eq.s32.totalorder %s23, 0
      %p86 = por %p84, %p85
      %p87 = scmp.ne.s32.totalorder %s75, %s76
      %p88 = scmp.eq.s32.totalorder %s24, 1
      %p89 = por %p87, %p88
      %p91 = scmp.ne.s32.totalorder %s76, %s90
      %p92 = scmp.eq.s32.totalorder %s24, 0
      %p93 = por %p91, %p92
      %s94 = ssub.s32 %s18, %s25
      %p95 = scmp.eq.s32.totalorder %s94, 0
      %s97 = sadd.s32 %s96, 1
      %s98 = scalar_select %p95, %s96, %s97
      %p101 = pneg %p95
      %p102 = scmp.eq.s32.totalorder %s18, 1
      %p103 = por %p101, %p102
      %p104 = scmp.ne.s32.totalorder %s96, %s99
      %p105 = scmp.eq.s32.totalorder %s18, 0
      %p106 = por %p104, %p105
      %p107 = scmp.ne.s32.totalorder %s96, %s99
      %p108 = scmp.eq.s32.totalorder %s23, 1
      %p109 = por %p107, %p108
      %p110 = scmp.ne.s32.totalorder %s99, %s100
      %p111 = scmp.eq.s32.totalorder %s23, 0
      %p112 = por %p110, %p111
      %p113 = scmp.ne.s32.totalorder %s99, %s100
      %p114 = scmp.eq.s32.totalorder %s24, 1
      %p115 = por %p113, %p114
      %p117 = scmp.ne.s32.totalorder %s100, %s116
      %p118 = scmp.eq.s32.totalorder %s24, 0
      %p119 = por %p117, %p118
      %s120 = ssub.s32 %s18, %s25
      %p121 = scmp.eq.s32.totalorder %s120, 0
      %s123 = sadd.s32 %s122, 1
      %s124 = scalar_select %p121, %s122, %s123
      %p127 = pneg %p121
      %p128 = scmp.eq.s32.totalorder %s18, 1
      %p129 = por %p127, %p128
      %p130 = scmp.ne.s32.totalorder %s122, %s125
      %p131 = scmp.eq.s32.totalorder %s18, 0
      %p132 = por %p130, %p131
      %p133 = scmp.ne.s32.totalorder %s122, %s125
      %p134 = scmp.eq.s32.totalorder %s23, 1
      %p135 = por %p133, %p134
      %p136 = scmp.ne.s32.totalorder %s125, %s126
      %p137 = scmp.eq.s32.totalorder %s23, 0
      %p138 = por %p136, %p137
      %p139 = scmp.ne.s32.totalorder %s125, %s126
      %p140 = scmp.eq.s32.totalorder %s24, 1
      %p141 = por %p139, %p140
      %p143 = scmp.ne.s32.totalorder %s126, %s142
      %p144 = scmp.eq.s32.totalorder %s24, 0
      %p145 = por %p143, %p144
      %s146 = ssub.s32 %s18, %s25
      %p147 = scmp.eq.s32.totalorder %s146, 0
      %s149 = sadd.s32 %s148, 1
      %s150 = scalar_select %p147, %s148, %s149
      %p153 = pneg %p147
      %p154 = scmp.eq.s32.totalorder %s18, 1
      %p155 = por %p153, %p154
      %p156 = scmp.ne.s32.totalorder %s148, %s151
      %p157 = scmp.eq.s32.totalorder %s18, 0
      %p158 = por %p156, %p157
      %p159 = scmp.ne.s32.totalorder %s148, %s151
      %p160 = scmp.eq.s32.totalorder %s23, 1
      %p161 = por %p159, %p160
      %p162 = scmp.ne.s32.totalorder %s151, %s152
      %p163 = scmp.eq.s32.totalorder %s23, 0
      %p164 = por %p162, %p163
      %p165 = scmp.ne.s32.totalorder %s151, %s152
      %p166 = scmp.eq.s32.totalorder %s24, 1
      %p167 = por %p165, %p166
      %p169 = scmp.ne.s32.totalorder %s152, %s168
      %p170 = scmp.eq.s32.totalorder %s24, 0
      %p171 = por %p169, %p170
      %p172 = scmp.le.s32.totalorder 1, %s18
      %p173 = scmp.lt.s32.totalorder %s18, 3
      %p174 = pnand %p172, %p173
      %p175 = pneg %p174
      // Predicated region
      $region9: #{tpu_custom_call.1} parent=5 // pred_check
        _
      $region10: #{tpu_custom_call.1} parent=5 // pred_check_branch
        %177 = sbr.rel (%p174) target = $region12
      $region11: #{tpu_custom_call.1} parent=5 // pred_region
        %s178 = ssub.s32 %s18, 1
        // Predicated region
        $region13: #{tpu_custom_call.1} parent=11 // pred_check
          %p179 = pneg %p65
        $region14: #{tpu_custom_call.1} parent=11 // pred_check_branch
          %181 = sbr.rel (%p179) target = $region16
        $region15: #{tpu_custom_call.1} parent=11 // pred_region
          _
        $region16: #{tpu_custom_call.1} parent=11 // pred_fallthru
          _
        // Predicated region
        $region17: #{tpu_custom_call.1} parent=11 // pred_check
          %p182 = pneg %p86
        $region18: #{tpu_custom_call.1} parent=11 // pred_check_branch
          %184 = sbr.rel (%p182) target = $region20
        $region19: #{tpu_custom_call.1} parent=11 // pred_region
          _
        $region20: #{tpu_custom_call.1} parent=11 // pred_fallthru
          _
      $region12: #{tpu_custom_call.1} parent=5 // pred_fallthru
        _
      %p185 = scmp.lt.s32.totalorder %s18, 2
      // Predicated region
      $region21: #{tpu_custom_call.1} parent=5 // pred_check
        %p186 = pneg %p185
      $region22: #{tpu_custom_call.1} parent=5 // pred_check_branch
        %188 = sbr.rel (%p186) target = $region24
      $region23: #{tpu_custom_call.1} parent=5 // pred_region
        // Predicated region
        $region25: #{tpu_custom_call.1} parent=23 // pred_check
          %p189 = pneg %p38
        $region26: #{tpu_custom_call.1} parent=23 // pred_check_branch
          %191 = sbr.rel (%p189) target = $region28
        $region27: #{tpu_custom_call.1} parent=23 // pred_region
          %p192 = scmp.lt.s32.totalorder %s18, 1
          %s193 = scalar_select %p192, %s18, 1
          %s194 = smul.addr %s193, 32
          %s195 = smul.addr %s194, 4
          %s196 = scalar_lea.vmem %s0, %s195
        $region28: #{tpu_custom_call.1} parent=23 // pred_fallthru
          _
      $region24: #{tpu_custom_call.1} parent=5 // pred_fallthru
        _
      %p197 = scmp.le.s32.totalorder 1, %s18
      %p198 = scmp.lt.s32.totalorder %s18, 3
      %p199 = pnand %p197, %p198
      %p200 = pneg %p199
      // Predicated region
      $region29: #{tpu_custom_call.1} parent=5 // pred_check
        _
      $region30: #{tpu_custom_call.1} parent=5 // pred_check_branch
        %202 = sbr.rel (%p199) target = $region32
      $region31: #{tpu_custom_call.1} parent=5 // pred_region
        %s203 = ssub.s32 %s18, 1
        %p204 = scmp.lt.s32.totalorder %s23, 1
        %s205 = scalar_select %p204, %s23, 1
        %s206 = smul.addr %s205, 32
        %s207 = smul.addr %s206, 4
        %s208 = scalar_lea.vmem %s0, %s207
        %p209 = pneg %p44
        %p210 = pneg %p41
        %p211 = pneg %p65
        %p212 = pneg %p62
        %p213 = pneg %p86
        %p214 = pneg %p83
        %p215 = pneg %p112
        %p216 = pneg %p109
        %s217 = sand.u32 %s99, 1
        %s218 = scalar_lea.sflag [#allocation3], %s217
        %s219 = sand.u32 %s99, 1
        %s220 = smul.addr %s219, 8
        %s221 = scalar_lea.vmem [#allocation2], %s220
        %p222 = pneg %p138
        %p223 = pneg %p135
        %s224 = sand.u32 %s23, 1
        %s225 = scalar_lea.sflag [#allocation5], %s224
        %s226 = sand.u32 %s125, 1
        %s227 = scalar_lea.vmem [#allocation4], %s226
        %p228 = pneg %p164
        %p229 = pneg %p161
        %s230 = sand.u32 %s23, 1
        %s231 = scalar_lea.sflag [#allocation5], %s230
        %s232 = sand.u32 %s151, 1
        %s233 = scalar_lea.vmem [#allocation6], %s232
        %p234 = scmp.lt.s32.totalorder %s23, 1
        %s235 = scalar_select %p234, %s23, 1
        %s236 = smul.addr %s235, 32
        %s237 = smul.addr %s236, 4
        %s238 = scalar_lea.vmem %s0, %s237
        %v240 = vld [vmem:[%s238] sm:$0xf]
        %v241 = vld [vmem:[%s238 + $0x4] sm:$0xf]
        %v242 = vld [vmem:[%s238 + $0x8] sm:$0xf]
        %v243 = vld [vmem:[%s238 + $0xc] sm:$0xf]
        %v244 = vld [vmem:[%s238 + $0x10] sm:$0xf]
        %v245 = vld [vmem:[%s238 + $0x14] sm:$0xf]
        %v246 = vld [vmem:[%s238 + $0x18] sm:$0xf]
        %v247 = vld [vmem:[%s238 + $0x1c] sm:$0xf]
        %v248 = vld [vmem:[%s238 + $0x20] sm:$0xf]
        %v249 = vld [vmem:[%s238 + $0x24] sm:$0xf]
        %v250 = vld [vmem:[%s238 + $0x28] sm:$0xf]
        %v251 = vld [vmem:[%s238 + $0x2c] sm:$0xf]
        %v252 = vld [vmem:[%s238 + $0x30] sm:$0xf]
        %v253 = vld [vmem:[%s238 + $0x34] sm:$0xf]
        %v254 = vld [vmem:[%s238 + $0x38] sm:$0xf]
        %v255 = vld [vmem:[%s238 + $0x3c] sm:$0xf]
        %v256 = vld [vmem:[%s238 + $0x40] sm:$0xf]
        %v257 = vld [vmem:[%s238 + $0x44] sm:$0xf]
        %v258 = vld [vmem:[%s238 + $0x48] sm:$0xf]
        %v259 = vld [vmem:[%s238 + $0x4c] sm:$0xf]
        %v260 = vld [vmem:[%s238 + $0x50] sm:$0xf]
        %v261 = vld [vmem:[%s238 + $0x54] sm:$0xf]
        %v262 = vld [vmem:[%s238 + $0x58] sm:$0xf]
        %v263 = vld [vmem:[%s238 + $0x5c] sm:$0xf]
        %v264 = vld [vmem:[%s238 + $0x60] sm:$0xf]
        %v265 = vld [vmem:[%s238 + $0x64] sm:$0xf]
        %v266 = vld [vmem:[%s238 + $0x68] sm:$0xf]
        %v267 = vld [vmem:[%s238 + $0x6c] sm:$0xf]
        %v268 = vld [vmem:[%s238 + $0x70] sm:$0xf]
        %v269 = vld [vmem:[%s238 + $0x74] sm:$0xf]
        %v270 = vld [vmem:[%s238 + $0x78] sm:$0xf]
        %v271 = vld [vmem:[%s238 + $0x7c] sm:$0xf]
        %v304 = vunpack.c.l.b16 %v240
        %v305 = vunpack.c.l.b16 %v241
        %v306 = vunpack.c.l.b16 %v242
        %v307 = vunpack.c.l.b16 %v243
        %v308 = vunpack.c.l.b16 %v244
        %v309 = vunpack.c.l.b16 %v245
        %v310 = vunpack.c.l.b16 %v246
        %v311 = vunpack.c.l.b16 %v247
        %v312 = vunpack.c.l.b16 %v248
        %v313 = vunpack.c.l.b16 %v249
        %v314 = vunpack.c.l.b16 %v250
        %v315 = vunpack.c.l.b16 %v251
        %v316 = vunpack.c.l.b16 %v252
        %v317 = vunpack.c.l.b16 %v253
        %v318 = vunpack.c.l.b16 %v254
        %v319 = vunpack.c.l.b16 %v255
        %v320 = vunpack.c.l.b16 %v256
        %v321 = vunpack.c.l.b16 %v257
        %v322 = vunpack.c.l.b16 %v258
        %v323 = vunpack.c.l.b16 %v259
        %v324 = vunpack.c.l.b16 %v260
        %v325 = vunpack.c.l.b16 %v261
        %v326 = vunpack.c.l.b16 %v262
        %v327 = vunpack.c.l.b16 %v263
        %v328 = vunpack.c.l.b16 %v264
        %v329 = vunpack.c.l.b16 %v265
        %v330 = vunpack.c.l.b16 %v266
        %v331 = vunpack.c.l.b16 %v267
        %v332 = vunpack.c.l.b16 %v268
        %v333 = vunpack.c.l.b16 %v269
        %v334 = vunpack.c.l.b16 %v270
        %v335 = vunpack.c.l.b16 %v271
        %v336 = vpack.c.b16 %v305, %v304
        %v337 = vpack.c.b16 %v307, %v306
        %v338 = vpack.c.b16 %v309, %v308
        %v339 = vpack.c.b16 %v311, %v310
        %v340 = vpack.c.b16 %v313, %v312
        %v341 = vpack.c.b16 %v315, %v314
        %v342 = vpack.c.b16 %v317, %v316
        %v343 = vpack.c.b16 %v319, %v318
        %v344 = vpack.c.b16 %v321, %v320
        %v345 = vpack.c.b16 %v323, %v322
        %v346 = vpack.c.b16 %v325, %v324
        %v347 = vpack.c.b16 %v327, %v326
        %v348 = vpack.c.b16 %v329, %v328
        %v349 = vpack.c.b16 %v331, %v330
        %v350 = vpack.c.b16 %v333, %v332
        %v351 = vpack.c.b16 %v335, %v334
        %v353 = vshrl.u32 0, 16
        %v355 = vrot.slane %v353, 7
        %v356 = vshll.u32 0, 16
        %v358 = vor.u32 %v355, %v356
        %v360 = vshrl.u32 %v336, 16
        %v362 = vrot.slane %v360, 7
        %v363 = vshll.u32 %v336, 16
        %v365 = vor.u32 %v362, %v363
        %v367 = vshrl.u32 %v337, 16
        %v369 = vrot.slane %v367, 7
        %v370 = vshll.u32 %v337, 16
        %v372 = vor.u32 %v369, %v370
        %v374 = vshrl.u32 %v338, 16
        %v376 = vrot.slane %v374, 7
        %v377 = vshll.u32 %v338, 16
        %v379 = vor.u32 %v376, %v377
        %v381 = vshrl.u32 %v339, 16
        %v383 = vrot.slane %v381, 7
        %v384 = vshll.u32 %v339, 16
        %v386 = vor.u32 %v383, %v384
        %v388 = vshrl.u32 %v340, 16
        %v390 = vrot.slane %v388, 7
        %v391 = vshll.u32 %v340, 16
        %v393 = vor.u32 %v390, %v391
        %v395 = vshrl.u32 %v341, 16
        %v397 = vrot.slane %v395, 7
        %v398 = vshll.u32 %v341, 16
        %v400 = vor.u32 %v397, %v398
        %v402 = vshrl.u32 %v342, 16
        %v404 = vrot.slane %v402, 7
        %v405 = vshll.u32 %v342, 16
        %v407 = vor.u32 %v404, %v405
        %v409 = vshrl.u32 %v343, 16
        %v411 = vrot.slane %v409, 7
        %v412 = vshll.u32 %v343, 16
        %v414 = vor.u32 %v411, %v412
        %v416 = vshrl.u32 %v344, 16
        %v418 = vrot.slane %v416, 7
        %v419 = vshll.u32 %v344, 16
        %v421 = vor.u32 %v418, %v419
        %v423 = vshrl.u32 %v345, 16
        %v425 = vrot.slane %v423, 7
        %v426 = vshll.u32 %v345, 16
        %v428 = vor.u32 %v425, %v426
        %v430 = vshrl.u32 %v346, 16
        %v432 = vrot.slane %v430, 7
        %v433 = vshll.u32 %v346, 16
        %v435 = vor.u32 %v432, %v433
        %v437 = vshrl.u32 %v347, 16
        %v439 = vrot.slane %v437, 7
        %v440 = vshll.u32 %v347, 16
        %v442 = vor.u32 %v439, %v440
        %v444 = vshrl.u32 %v348, 16
        %v446 = vrot.slane %v444, 7
        %v447 = vshll.u32 %v348, 16
        %v449 = vor.u32 %v446, %v447
        %v451 = vshrl.u32 %v349, 16
        %v453 = vrot.slane %v451, 7
        %v454 = vshll.u32 %v349, 16
        %v456 = vor.u32 %v453, %v454
        %v458 = vshrl.u32 %v350, 16
        %v460 = vrot.slane %v458, 7
        %v461 = vshll.u32 %v350, 16
        %v463 = vor.u32 %v460, %v461
        %v465 = vshrl.u32 %v351, 16
        %v467 = vrot.slane %v465, 7
        %v468 = vshll.u32 %v351, 16
        %v470 = vor.u32 %v467, %v468
        %vm505 = vcmask 1040384
        %vm506 = vsmask.f32 256
        %vm507 = vmand %vm505, %vm506
        %v508 = vsel %vm507, 0, %v358
        %v509 = vsel %vm507, 0, %v365
        %v510 = vsel %vm507, 0, %v372
        %v511 = vsel %vm507, 0, %v379
        %v512 = vsel %vm507, 0, %v386
        %v513 = vsel %vm507, 0, %v393
        %v514 = vsel %vm507, 0, %v400
        %v515 = vsel %vm507, 0, %v407
        %v516 = vsel %vm507, 0, %v414
        %v517 = vsel %vm507, 0, %v421
        %v518 = vsel %vm507, 0, %v428
        %v519 = vsel %vm507, 0, %v435
        %v520 = vsel %vm507, 0, %v442
        %v521 = vsel %vm507, 0, %v449
        %v522 = vsel %vm507, 0, %v456
        %v523 = vsel %vm507, 0, %v463
        %v524 = vsel %vm507, 0, %v470
        %v525 = vsel %vm507, %v355, 0
        %v526 = vsel %vm507, %v362, 0
        %v527 = vsel %vm507, %v369, 0
        %v528 = vsel %vm507, %v376, 0
        %v529 = vsel %vm507, %v383, 0
        %v530 = vsel %vm507, %v390, 0
        %v531 = vsel %vm507, %v397, 0
        %v532 = vsel %vm507, %v404, 0
        %v533 = vsel %vm507, %v411, 0
        %v534 = vsel %vm507, %v418, 0
        %v535 = vsel %vm507, %v425, 0
        %v536 = vsel %vm507, %v432, 0
        %v537 = vsel %vm507, %v439, 0
        %v538 = vsel %vm507, %v446, 0
        %v539 = vsel %vm507, %v453, 0
        %v540 = vsel %vm507, %v460, 0
        %v541 = vsel %vm507, %v467, 0
        %vm542 = vsmask.f32 7424
        %v544 = vshrl.u32 %v508, 16
        %v546 = vshll.u32 %v508, 16
        %v548 = vrot.slane %v546, 1
        %v549 = vor.u32 %v544, %v548
        %v551 = vshll.u32 %v525, 16
        %v553 = vrot.slane %v551, 1
        %v554 = vsel %vm542, %v549, %v553
        %v556 = vshrl.u32 %v509, 16
        %v558 = vshll.u32 %v509, 16
        %v560 = vrot.slane %v558, 1
        %v561 = vor.u32 %v556, %v560
        %v563 = vshll.u32 %v526, 16
        %v565 = vrot.slane %v563, 1
        %v566 = vsel %vm542, %v561, %v565
        %v568 = vshrl.u32 %v510, 16
        %v570 = vshll.u32 %v510, 16
        %v572 = vrot.slane %v570, 1
        %v573 = vor.u32 %v568, %v572
        %v575 = vshll.u32 %v527, 16
        %v577 = vrot.slane %v575, 1
        %v578 = vsel %vm542, %v573, %v577
        %v580 = vshrl.u32 %v511, 16
        %v582 = vshll.u32 %v511, 16
        %v584 = vrot.slane %v582, 1
        %v585 = vor.u32 %v580, %v584
        %v587 = vshll.u32 %v528, 16
        %v589 = vrot.slane %v587, 1
        %v590 = vsel %vm542, %v585, %v589
        %v592 = vshrl.u32 %v512, 16
        %v594 = vshll.u32 %v512, 16
        %v596 = vrot.slane %v594, 1
        %v597 = vor.u32 %v592, %v596
        %v599 = vshll.u32 %v529, 16
        %v601 = vrot.slane %v599, 1
        %v602 = vsel %vm542, %v597, %v601
        %v604 = vshrl.u32 %v513, 16
        %v606 = vshll.u32 %v513, 16
        %v608 = vrot.slane %v606, 1
        %v609 = vor.u32 %v604, %v608
        %v611 = vshll.u32 %v530, 16
        %v613 = vrot.slane %v611, 1
        %v614 = vsel %vm542, %v609, %v613
        %v616 = vshrl.u32 %v514, 16
        %v618 = vshll.u32 %v514, 16
        %v620 = vrot.slane %v618, 1
        %v621 = vor.u32 %v616, %v620
        %v623 = vshll.u32 %v531, 16
        %v625 = vrot.slane %v623, 1
        %v626 = vsel %vm542, %v621, %v625
        %v628 = vshrl.u32 %v515, 16
        %v630 = vshll.u32 %v515, 16
        %v632 = vrot.slane %v630, 1
        %v633 = vor.u32 %v628, %v632
        %v635 = vshll.u32 %v532, 16
        %v637 = vrot.slane %v635, 1
        %v638 = vsel %vm542, %v633, %v637
        %v640 = vshrl.u32 %v516, 16
        %v642 = vshll.u32 %v516, 16
        %v644 = vrot.slane %v642, 1
        %v645 = vor.u32 %v640, %v644
        %v647 = vshll.u32 %v533, 16
        %v649 = vrot.slane %v647, 1
        %v650 = vsel %vm542, %v645, %v649
        %v652 = vshrl.u32 %v517, 16
        %v654 = vshll.u32 %v517, 16
        %v656 = vrot.slane %v654, 1
        %v657 = vor.u32 %v652, %v656
        %v659 = vshll.u32 %v534, 16
        %v661 = vrot.slane %v659, 1
        %v662 = vsel %vm542, %v657, %v661
        %v664 = vshrl.u32 %v518, 16
        %v666 = vshll.u32 %v518, 16
        %v668 = vrot.slane %v666, 1
        %v669 = vor.u32 %v664, %v668
        %v671 = vshll.u32 %v535, 16
        %v673 = vrot.slane %v671, 1
        %v674 = vsel %vm542, %v669, %v673
        %v676 = vshrl.u32 %v519, 16
        %v678 = vshll.u32 %v519, 16
        %v680 = vrot.slane %v678, 1
        %v681 = vor.u32 %v676, %v680
        %v683 = vshll.u32 %v536, 16
        %v685 = vrot.slane %v683, 1
        %v686 = vsel %vm542, %v681, %v685
        %v688 = vshrl.u32 %v520, 16
        %v690 = vshll.u32 %v520, 16
        %v692 = vrot.slane %v690, 1
        %v693 = vor.u32 %v688, %v692
        %v695 = vshll.u32 %v537, 16
        %v697 = vrot.slane %v695, 1
        %v698 = vsel %vm542, %v693, %v697
        %v700 = vshrl.u32 %v521, 16
        %v702 = vshll.u32 %v521, 16
        %v704 = vrot.slane %v702, 1
        %v705 = vor.u32 %v700, %v704
        %v707 = vshll.u32 %v538, 16
        %v709 = vrot.slane %v707, 1
        %v710 = vsel %vm542, %v705, %v709
        %v712 = vshrl.u32 %v522, 16
        %v714 = vshll.u32 %v522, 16
        %v716 = vrot.slane %v714, 1
        %v717 = vor.u32 %v712, %v716
        %v719 = vshll.u32 %v539, 16
        %v721 = vrot.slane %v719, 1
        %v722 = vsel %vm542, %v717, %v721
        %v724 = vshrl.u32 %v523, 16
        %v726 = vshll.u32 %v523, 16
        %v728 = vrot.slane %v726, 1
        %v729 = vor.u32 %v724, %v728
        %v731 = vshll.u32 %v540, 16
        %v733 = vrot.slane %v731, 1
        %v734 = vsel %vm542, %v729, %v733
        %735 = vrot.lane.b32.xlu0 %v554, 4
        %v736 = vpop.permute.xlu0 %735
        %737 = vrot.lane.b32.xlu0 %v566, 4
        %v738 = vpop.permute.xlu0 %737
        %739 = vrot.lane.b32.xlu0 %v578, 4
        %v740 = vpop.permute.xlu0 %739
        %741 = vrot.lane.b32.xlu0 %v590, 4
        %v742 = vpop.permute.xlu0 %741
        %743 = vrot.lane.b32.xlu0 %v602, 4
        %v744 = vpop.permute.xlu0 %743
        %745 = vrot.lane.b32.xlu0 %v614, 4
        %v746 = vpop.permute.xlu0 %745
        %747 = vrot.lane.b32.xlu0 %v626, 4
        %v748 = vpop.permute.xlu0 %747
        %749 = vrot.lane.b32.xlu0 %v638, 4
        %v750 = vpop.permute.xlu0 %749
        %751 = vrot.lane.b32.xlu0 %v650, 4
        %v752 = vpop.permute.xlu0 %751
        %753 = vrot.lane.b32.xlu0 %v662, 4
        %v754 = vpop.permute.xlu0 %753
        %755 = vrot.lane.b32.xlu0 %v674, 4
        %v756 = vpop.permute.xlu0 %755
        %757 = vrot.lane.b32.xlu0 %v686, 4
        %v758 = vpop.permute.xlu0 %757
        %759 = vrot.lane.b32.xlu0 %v698, 4
        %v760 = vpop.permute.xlu0 %759
        %761 = vrot.lane.b32.xlu0 %v710, 4
        %v762 = vpop.permute.xlu0 %761
        %763 = vrot.lane.b32.xlu0 %v722, 4
        %v764 = vpop.permute.xlu0 %763
        %765 = vrot.lane.b32.xlu0 %v734, 4
        %v766 = vpop.permute.xlu0 %765
        %vm799 = vcmask 1046528
        %v800 = vrot.slane %v508, 1
        %v801 = vrot.slane %v525, 1
        %v802 = vsel %vm799, %v800, %v801
        %v803 = vrot.slane %v509, 1
        %v804 = vrot.slane %v526, 1
        %v805 = vsel %vm799, %v803, %v804
        %v806 = vrot.slane %v510, 1
        %v807 = vrot.slane %v527, 1
        %v808 = vsel %vm799, %v806, %v807
        %v809 = vrot.slane %v511, 1
        %v810 = vrot.slane %v528, 1
        %v811 = vsel %vm799, %v809, %v810
        %v812 = vrot.slane %v512, 1
        %v813 = vrot.slane %v529, 1
        %v814 = vsel %vm799, %v812, %v813
        %v815 = vrot.slane %v513, 1
        %v816 = vrot.slane %v530, 1
        %v817 = vsel %vm799, %v815, %v816
        %v818 = vrot.slane %v514, 1
        %v819 = vrot.slane %v531, 1
        %v820 = vsel %vm799, %v818, %v819
        %v821 = vrot.slane %v515, 1
        %v822 = vrot.slane %v532, 1
        %v823 = vsel %vm799, %v821, %v822
        %v824 = vrot.slane %v516, 1
        %v825 = vrot.slane %v533, 1
        %v826 = vsel %vm799, %v824, %v825
        %v827 = vrot.slane %v517, 1
        %v828 = vrot.slane %v534, 1
        %v829 = vsel %vm799, %v827, %v828
        %v830 = vrot.slane %v518, 1
        %v831 = vrot.slane %v535, 1
        %v832 = vsel %vm799, %v830, %v831
        %v833 = vrot.slane %v519, 1
        %v834 = vrot.slane %v536, 1
        %v835 = vsel %vm799, %v833, %v834
        %v836 = vrot.slane %v520, 1
        %v837 = vrot.slane %v537, 1
        %v838 = vsel %vm799, %v836, %v837
        %v839 = vrot.slane %v521, 1
        %v840 = vrot.slane %v538, 1
        %v841 = vsel %vm799, %v839, %v840
        %v842 = vrot.slane %v522, 1
        %v843 = vrot.slane %v539, 1
        %v844 = vsel %vm799, %v842, %v843
        %v845 = vrot.slane %v523, 1
        %v846 = vrot.slane %v540, 1
        %v847 = vsel %vm799, %v845, %v846
        %848 = vrot.lane.b32.xlu0 %v802, 8
        %v849 = vpop.permute.xlu0 %848
        %850 = vrot.lane.b32.xlu0 %v805, 8
        %v851 = vpop.permute.xlu0 %850
        %852 = vrot.lane.b32.xlu0 %v808, 8
        %v853 = vpop.permute.xlu0 %852
        %854 = vrot.lane.b32.xlu0 %v811, 8
        %v855 = vpop.permute.xlu0 %854
        %856 = vrot.lane.b32.xlu0 %v814, 8
        %v857 = vpop.permute.xlu0 %856
        %858 = vrot.lane.b32.xlu0 %v817, 8
        %v859 = vpop.permute.xlu0 %858
        %860 = vrot.lane.b32.xlu0 %v820, 8
        %v861 = vpop.permute.xlu0 %860
        %862 = vrot.lane.b32.xlu0 %v823, 8
        %v863 = vpop.permute.xlu0 %862
        %864 = vrot.lane.b32.xlu0 %v826, 8
        %v865 = vpop.permute.xlu0 %864
        %866 = vrot.lane.b32.xlu0 %v829, 8
        %v867 = vpop.permute.xlu0 %866
        %868 = vrot.lane.b32.xlu0 %v832, 8
        %v869 = vpop.permute.xlu0 %868
        %870 = vrot.lane.b32.xlu0 %v835, 8
        %v871 = vpop.permute.xlu0 %870
        %872 = vrot.lane.b32.xlu0 %v838, 8
        %v873 = vpop.permute.xlu0 %872
        %874 = vrot.lane.b32.xlu0 %v841, 8
        %v875 = vpop.permute.xlu0 %874
        %876 = vrot.lane.b32.xlu0 %v844, 8
        %v877 = vpop.permute.xlu0 %876
        %878 = vrot.lane.b32.xlu0 %v847, 8
        %v879 = vpop.permute.xlu0 %878
        %881 = vrot.lane.b32.xlu0 %v509, 12
        %v882 = vpop.permute.xlu0 %881
        %883 = vrot.lane.b32.xlu0 %v510, 12
        %v884 = vpop.permute.xlu0 %883
        %885 = vrot.lane.b32.xlu0 %v511, 12
        %v886 = vpop.permute.xlu0 %885
        %887 = vrot.lane.b32.xlu0 %v512, 12
        %v888 = vpop.permute.xlu0 %887
        %889 = vrot.lane.b32.xlu0 %v513, 12
        %v890 = vpop.permute.xlu0 %889
        %891 = vrot.lane.b32.xlu0 %v514, 12
        %v892 = vpop.permute.xlu0 %891
        %893 = vrot.lane.b32.xlu0 %v515, 12
        %v894 = vpop.permute.xlu0 %893
        %895 = vrot.lane.b32.xlu0 %v516, 12
        %v896 = vpop.permute.xlu0 %895
        %897 = vrot.lane.b32.xlu0 %v517, 12
        %v898 = vpop.permute.xlu0 %897
        %899 = vrot.lane.b32.xlu0 %v518, 12
        %v900 = vpop.permute.xlu0 %899
        %901 = vrot.lane.b32.xlu0 %v519, 12
        %v902 = vpop.permute.xlu0 %901
        %903 = vrot.lane.b32.xlu0 %v520, 12
        %v904 = vpop.permute.xlu0 %903
        %905 = vrot.lane.b32.xlu0 %v521, 12
        %v906 = vpop.permute.xlu0 %905
        %907 = vrot.lane.b32.xlu0 %v522, 12
        %v908 = vpop.permute.xlu0 %907
        %909 = vrot.lane.b32.xlu0 %v523, 12
        %v910 = vpop.permute.xlu0 %909
        %911 = vrot.lane.b32.xlu0 %v524, 12
        %v912 = vpop.permute.xlu0 %911
        %v914 = vshrl.u32 %v524, 16
        %v916 = vshll.u32 %v524, 16
        %v918 = vrot.slane %v916, 1
        %v919 = vor.u32 %v914, %v918
        %v921 = vshll.u32 %v541, 16
        %v923 = vrot.slane %v921, 1
        %v924 = vsel %vm542, %v919, %v923
        %925 = vrot.lane.b32.xlu0 %v566, 16
        %v926 = vpop.permute.xlu0 %925
        %927 = vrot.lane.b32.xlu0 %v578, 16
        %v928 = vpop.permute.xlu0 %927
        %929 = vrot.lane.b32.xlu0 %v590, 16
        %v930 = vpop.permute.xlu0 %929
        %931 = vrot.lane.b32.xlu0 %v602, 16
        %v932 = vpop.permute.xlu0 %931
        %933 = vrot.lane.b32.xlu0 %v614, 16
        %v934 = vpop.permute.xlu0 %933
        %935 = vrot.lane.b32.xlu0 %v626, 16
        %v936 = vpop.permute.xlu0 %935
        %937 = vrot.lane.b32.xlu0 %v638, 16
        %v938 = vpop.permute.xlu0 %937
        %939 = vrot.lane.b32.xlu0 %v650, 16
        %v940 = vpop.permute.xlu0 %939
        %941 = vrot.lane.b32.xlu0 %v662, 16
        %v942 = vpop.permute.xlu0 %941
        %943 = vrot.lane.b32.xlu0 %v674, 16
        %v944 = vpop.permute.xlu0 %943
        %945 = vrot.lane.b32.xlu0 %v686, 16
        %v946 = vpop.permute.xlu0 %945
        %947 = vrot.lane.b32.xlu0 %v698, 16
        %v948 = vpop.permute.xlu0 %947
        %949 = vrot.lane.b32.xlu0 %v710, 16
        %v950 = vpop.permute.xlu0 %949
        %951 = vrot.lane.b32.xlu0 %v722, 16
        %v952 = vpop.permute.xlu0 %951
        %953 = vrot.lane.b32.xlu0 %v734, 16
        %v954 = vpop.permute.xlu0 %953
        %955 = vrot.lane.b32.xlu0 %v924, 16
        %v956 = vpop.permute.xlu0 %955
        %v958 = vrot.slane %v524, 1
        %v959 = vrot.slane %v541, 1
        %v960 = vsel %vm799, %v958, %v959
        %961 = vrot.lane.b32.xlu0 %v805, 20
        %v962 = vpop.permute.xlu0 %961
        %963 = vrot.lane.b32.xlu0 %v808, 20
        %v964 = vpop.permute.xlu0 %963
        %965 = vrot.lane.b32.xlu0 %v811, 20
        %v966 = vpop.permute.xlu0 %965
        %967 = vrot.lane.b32.xlu0 %v814, 20
        %v968 = vpop.permute.xlu0 %967
        %969 = vrot.lane.b32.xlu0 %v817, 20
        %v970 = vpop.permute.xlu0 %969
        %971 = vrot.lane.b32.xlu0 %v820, 20
        %v972 = vpop.permute.xlu0 %971
        %973 = vrot.lane.b32.xlu0 %v823, 20
        %v974 = vpop.permute.xlu0 %973
        %975 = vrot.lane.b32.xlu0 %v826, 20
        %v976 = vpop.permute.xlu0 %975
        %977 = vrot.lane.b32.xlu0 %v829, 20
        %v978 = vpop.permute.xlu0 %977
        %979 = vrot.lane.b32.xlu0 %v832, 20
        %v980 = vpop.permute.xlu0 %979
        %981 = vrot.lane.b32.xlu0 %v835, 20
        %v982 = vpop.permute.xlu0 %981
        %983 = vrot.lane.b32.xlu0 %v838, 20
        %v984 = vpop.permute.xlu0 %983
        %985 = vrot.lane.b32.xlu0 %v841, 20
        %v986 = vpop.permute.xlu0 %985
        %987 = vrot.lane.b32.xlu0 %v844, 20
        %v988 = vpop.permute.xlu0 %987
        %989 = vrot.lane.b32.xlu0 %v847, 20
        %v990 = vpop.permute.xlu0 %989
        %991 = vrot.lane.b32.xlu0 %v960, 20
        %v992 = vpop.permute.xlu0 %991
        %993 = vrot.lane.b32.xlu0 %v510, 24
        %v994 = vpop.permute.xlu0 %993
        %995 = vrot.lane.b32.xlu0 %v511, 24
        %v996 = vpop.permute.xlu0 %995
        %997 = vrot.lane.b32.xlu0 %v512, 24
        %v998 = vpop.permute.xlu0 %997
        %999 = vrot.lane.b32.xlu0 %v513, 24
        %v1000 = vpop.permute.xlu0 %999
        %1001 = vrot.lane.b32.xlu0 %v514, 24
        %v1002 = vpop.permute.xlu0 %1001
        %1003 = vrot.lane.b32.xlu0 %v515, 24
        %v1004 = vpop.permute.xlu0 %1003
        %1005 = vrot.lane.b32.xlu0 %v516, 24
        %v1006 = vpop.permute.xlu0 %1005
        %1007 = vrot.lane.b32.xlu0 %v517, 24
        %v1008 = vpop.permute.xlu0 %1007
        %1009 = vrot.lane.b32.xlu0 %v518, 24
        %v1010 = vpop.permute.xlu0 %1009
        %1011 = vrot.lane.b32.xlu0 %v519, 24
        %v1012 = vpop.permute.xlu0 %1011
        %1013 = vrot.lane.b32.xlu0 %v520, 24
        %v1014 = vpop.permute.xlu0 %1013
        %1015 = vrot.lane.b32.xlu0 %v521, 24
        %v1016 = vpop.permute.xlu0 %1015
        %1017 = vrot.lane.b32.xlu0 %v522, 24
        %v1018 = vpop.permute.xlu0 %1017
        %1019 = vrot.lane.b32.xlu0 %v523, 24
        %v1020 = vpop.permute.xlu0 %1019
        %1021 = vrot.lane.b32.xlu0 %v524, 24
        %v1022 = vpop.permute.xlu0 %1021
        %1023 = vrot.lane.b32.xlu0 %v508, 24
        %v1024 = vpop.permute.xlu0 %1023
        %1025 = vrot.lane.b32.xlu0 %v578, 28
        %v1026 = vpop.permute.xlu0 %1025
        %1027 = vrot.lane.b32.xlu0 %v590, 28
        %v1028 = vpop.permute.xlu0 %1027
        %1029 = vrot.lane.b32.xlu0 %v602, 28
        %v1030 = vpop.permute.xlu0 %1029
        %1031 = vrot.lane.b32.xlu0 %v614, 28
        %v1032 = vpop.permute.xlu0 %1031
        %1033 = vrot.lane.b32.xlu0 %v626, 28
        %v1034 = vpop.permute.xlu0 %1033
        %1035 = vrot.lane.b32.xlu0 %v638, 28
        %v1036 = vpop.permute.xlu0 %1035
        %1037 = vrot.lane.b32.xlu0 %v650, 28
        %v1038 = vpop.permute.xlu0 %1037
        %1039 = vrot.lane.b32.xlu0 %v662, 28
        %v1040 = vpop.permute.xlu0 %1039
        %1041 = vrot.lane.b32.xlu0 %v674, 28
        %v1042 = vpop.permute.xlu0 %1041
        %1043 = vrot.lane.b32.xlu0 %v686, 28
        %v1044 = vpop.permute.xlu0 %1043
        %1045 = vrot.lane.b32.xlu0 %v698, 28
        %v1046 = vpop.permute.xlu0 %1045
        %1047 = vrot.lane.b32.xlu0 %v710, 28
        %v1048 = vpop.permute.xlu0 %1047
        %1049 = vrot.lane.b32.xlu0 %v722, 28
        %v1050 = vpop.permute.xlu0 %1049
        %1051 = vrot.lane.b32.xlu0 %v734, 28
        %v1052 = vpop.permute.xlu0 %1051
        %1053 = vrot.lane.b32.xlu0 %v924, 28
        %v1054 = vpop.permute.xlu0 %1053
        %1055 = vrot.lane.b32.xlu0 %v554, 28
        %v1056 = vpop.permute.xlu0 %1055
        %1057 = vrot.lane.b32.xlu0 %v808, 32
        %v1058 = vpop.permute.xlu0 %1057
        %1059 = vrot.lane.b32.xlu0 %v811, 32
        %v1060 = vpop.permute.xlu0 %1059
        %1061 = vrot.lane.b32.xlu0 %v814, 32
        %v1062 = vpop.permute.xlu0 %1061
        %1063 = vrot.lane.b32.xlu0 %v817, 32
        %v1064 = vpop.permute.xlu0 %1063
        %1065 = vrot.lane.b32.xlu0 %v820, 32
        %v1066 = vpop.permute.xlu0 %1065
        %1067 = vrot.lane.b32.xlu0 %v823, 32
        %v1068 = vpop.permute.xlu0 %1067
        %1069 = vrot.lane.b32.xlu0 %v826, 32
        %v1070 = vpop.permute.xlu0 %1069
        %1071 = vrot.lane.b32.xlu0 %v829, 32
        %v1072 = vpop.permute.xlu0 %1071
        %1073 = vrot.lane.b32.xlu0 %v832, 32
        %v1074 = vpop.permute.xlu0 %1073
        %1075 = vrot.lane.b32.xlu0 %v835, 32
        %v1076 = vpop.permute.xlu0 %1075
        %1077 = vrot.lane.b32.xlu0 %v838, 32
        %v1078 = vpop.permute.xlu0 %1077
        %1079 = vrot.lane.b32.xlu0 %v841, 32
        %v1080 = vpop.permute.xlu0 %1079
        %1081 = vrot.lane.b32.xlu0 %v844, 32
        %v1082 = vpop.permute.xlu0 %1081
        %1083 = vrot.lane.b32.xlu0 %v847, 32
        %v1084 = vpop.permute.xlu0 %1083
        %1085 = vrot.lane.b32.xlu0 %v960, 32
        %v1086 = vpop.permute.xlu0 %1085
        %1087 = vrot.lane.b32.xlu0 %v802, 32
        %v1088 = vpop.permute.xlu0 %1087
        %vm1089 = vcmask 31744
        %v1091 = vsel %vm1089, %v508, %v736
        %v1093 = vsel %vm1089, %v509, %v738
        %v1095 = vsel %vm1089, %v510, %v740
        %v1097 = vsel %vm1089, %v511, %v742
        %v1099 = vsel %vm1089, %v512, %v744
        %v1101 = vsel %vm1089, %v513, %v746
        %v1103 = vsel %vm1089, %v514, %v748
        %v1105 = vsel %vm1089, %v515, %v750
        %v1107 = vsel %vm1089, %v516, %v752
        %v1109 = vsel %vm1089, %v517, %v754
        %v1111 = vsel %vm1089, %v518, %v756
        %v1113 = vsel %vm1089, %v519, %v758
        %v1115 = vsel %vm1089, %v520, %v760
        %v1117 = vsel %vm1089, %v521, %v762
        %v1119 = vsel %vm1089, %v522, %v764
        %v1121 = vsel %vm1089, %v523, %v766
        %vm1122 = vcmask 64512
        %v1124 = vsel %vm1122, %v1091, %v849
        %v1126 = vsel %vm1122, %v1093, %v851
        %v1128 = vsel %vm1122, %v1095, %v853
        %v1130 = vsel %vm1122, %v1097, %v855
        %v1132 = vsel %vm1122, %v1099, %v857
        %v1134 = vsel %vm1122, %v1101, %v859
        %v1136 = vsel %vm1122, %v1103, %v861
        %v1138 = vsel %vm1122, %v1105, %v863
        %v1140 = vsel %vm1122, %v1107, %v865
        %v1142 = vsel %vm1122, %v1109, %v867
        %v1144 = vsel %vm1122, %v1111, %v869
        %v1146 = vsel %vm1122, %v1113, %v871
        %v1148 = vsel %vm1122, %v1115, %v873
        %v1150 = vsel %vm1122, %v1117, %v875
        %v1152 = vsel %vm1122, %v1119, %v877
        %v1154 = vsel %vm1122, %v1121, %v879
        %vm1155 = vcmask 97280
        %v1157 = vsel %vm1155, %v1124, %v882
        %v1159 = vsel %vm1155, %v1126, %v884
        %v1161 = vsel %vm1155, %v1128, %v886
        %v1163 = vsel %vm1155, %v1130, %v888
        %v1165 = vsel %vm1155, %v1132, %v890
        %v1167 = vsel %vm1155, %v1134, %v892
        %v1169 = vsel %vm1155, %v1136, %v894
        %v1171 = vsel %vm1155, %v1138, %v896
        %v1173 = vsel %vm1155, %v1140, %v898
        %v1175 = vsel %vm1155, %v1142, %v900
        %v1177 = vsel %vm1155, %v1144, %v902
        %v1179 = vsel %vm1155, %v1146, %v904
        %v1181 = vsel %vm1155, %v1148, %v906
        %v1183 = vsel %vm1155, %v1150, %v908
        %v1185 = vsel %vm1155, %v1152, %v910
        %v1187 = vsel %vm1155, %v1154, %v912
        %vm1188 = vcmask 130048
        %v1190 = vsel %vm1188, %v1157, %v926
        %v1192 = vsel %vm1188, %v1159, %v928
        %v1194 = vsel %vm1188, %v1161, %v930
        %v1196 = vsel %vm1188, %v1163, %v932
        %v1198 = vsel %vm1188, %v1165, %v934
        %v1200 = vsel %vm1188, %v1167, %v936
        %v1202 = vsel %vm1188, %v1169, %v938
        %v1204 = vsel %vm1188, %v1171, %v940
        %v1206 = vsel %vm1188, %v1173, %v942
        %v1208 = vsel %vm1188, %v1175, %v944
        %v1210 = vsel %vm1188, %v1177, %v946
        %v1212 = vsel %vm1188, %v1179, %v948
        %v1214 = vsel %vm1188, %v1181, %v950
        %v1216 = vsel %vm1188, %v1183, %v952
        %v1218 = vsel %vm1188, %v1185, %v954
        %v1220 = vsel %vm1188, %v1187, %v956
        %vm1221 = vcmask 162816
        %v1223 = vsel %vm1221, %v1190, %v962
        %v1225 = vsel %vm1221, %v1192, %v964
        %v1227 = vsel %vm1221, %v1194, %v966
        %v1229 = vsel %vm1221, %v1196, %v968
        %v1231 = vsel %vm1221, %v1198, %v970
        %v1233 = vsel %vm1221, %v1200, %v972
        %v1235 = vsel %vm1221, %v1202, %v974
        %v1237 = vsel %vm1221, %v1204, %v976
        %v1239 = vsel %vm1221, %v1206, %v978
        %v1241 = vsel %vm1221, %v1208, %v980
        %v1243 = vsel %vm1221, %v1210, %v982
        %v1245 = vsel %vm1221, %v1212, %v984
        %v1247 = vsel %vm1221, %v1214, %v986
        %v1249 = vsel %vm1221, %v1216, %v988
        %v1251 = vsel %vm1221, %v1218, %v990
        %v1253 = vsel %vm1221, %v1220, %v992
        %vm1254 = vcmask 195584
        %v1256 = vsel %vm1254, %v1223, %v994
        %v1258 = vsel %vm1254, %v1225, %v996
        %v1260 = vsel %vm1254, %v1227, %v998
        %v1262 = vsel %vm1254, %v1229, %v1000
        %v1264 = vsel %vm1254, %v1231, %v1002
        %v1266 = vsel %vm1254, %v1233, %v1004
        %v1268 = vsel %vm1254, %v1235, %v1006
        %v1270 = vsel %vm1254, %v1237, %v1008
        %v1272 = vsel %vm1254, %v1239, %v1010
        %v1274 = vsel %vm1254, %v1241, %v1012
        %v1276 = vsel %vm1254, %v1243, %v1014
        %v1278 = vsel %vm1254, %v1245, %v1016
        %v1280 = vsel %vm1254, %v1247, %v1018
        %v1282 = vsel %vm1254, %v1249, %v1020
        %v1284 = vsel %vm1254, %v1251, %v1022
        %v1286 = vsel %vm1254, %v1253, %v1024
        %vm1287 = vcmask 228352
        %v1289 = vsel %vm1287, %v1256, %v1026
        %v1291 = vsel %vm1287, %v1258, %v1028
        %v1293 = vsel %vm1287, %v1260, %v1030
        %v1295 = vsel %vm1287, %v1262, %v1032
        %v1297 = vsel %vm1287, %v1264, %v1034
        %v1299 = vsel %vm1287, %v1266, %v1036
        %v1301 = vsel %vm1287, %v1268, %v1038
        %v1303 = vsel %vm1287, %v1270, %v1040
        %v1305 = vsel %vm1287, %v1272, %v1042
        %v1307 = vsel %vm1287, %v1274, %v1044
        %v1309 = vsel %vm1287, %v1276, %v1046
        %v1311 = vsel %vm1287, %v1278, %v1048
        %v1313 = vsel %vm1287, %v1280, %v1050
        %v1315 = vsel %vm1287, %v1282, %v1052
        %v1317 = vsel %vm1287, %v1284, %v1054
        %v1319 = vsel %vm1287, %v1286, %v1056
        %vm1320 = vcmask 261120
        %v1322 = vsel %vm1320, %v1289, %v1058
        %v1324 = vsel %vm1320, %v1291, %v1060
        %v1326 = vsel %vm1320, %v1293, %v1062
        %v1328 = vsel %vm1320, %v1295, %v1064
        %v1330 = vsel %vm1320, %v1297, %v1066
        %v1332 = vsel %vm1320, %v1299, %v1068
        %v1334 = vsel %vm1320, %v1301, %v1070
        %v1336 = vsel %vm1320, %v1303, %v1072
        %v1338 = vsel %vm1320, %v1305, %v1074
        %v1340 = vsel %vm1320, %v1307, %v1076
        %v1342 = vsel %vm1320, %v1309, %v1078
        %v1344 = vsel %vm1320, %v1311, %v1080
        %v1346 = vsel %vm1320, %v1313, %v1082
        %v1348 = vsel %vm1320, %v1315, %v1084
        %v1350 = vsel %vm1320, %v1317, %v1086
        %v1352 = vsel %vm1320, %v1319, %v1088
        %v1353 = vld [vmem:[%s1] sm:$0xf]
        %v1354 = vld [vmem:[%s1 + $0x4] sm:$0xf]
        %v1355 = vld [vmem:[%s1 + $0x8] sm:$0xf]
        %v1356 = vld [vmem:[%s1 + $0xc] sm:$0xf]
        %v1357 = vld [vmem:[%s1 + $0x10] sm:$0x3]
        %v1358 = vld [vmem:[%s2] sm:$0x1]
        %v1360 = vperm.slane %v1358, 0
        %v1367 = vunpack.c.l.b16 %v1353
        %v1368 = vunpack.c.l.b16 %v1354
        %v1369 = vunpack.c.l.b16 %v1355
        %v1370 = vunpack.c.l.b16 %v1356
        %v1371 = vunpack.c.l.b16 %v1357
        %v1372 = vpack.c.b16 %v1368, %v1367
        %v1373 = vpack.c.b16 %v1370, %v1369
        %v1374 = vpack.c.b16 %v1371, %v1371
        %vm1377 = vcmask 293888
        %v1378 = vsel %vm1377, %v1322, 0
        %v1380 = vsel %vm1377, %v1324, 0
        %v1382 = vsel %vm1377, %v1326, 0
        %v1384 = vsel %vm1377, %v1328, 0
        %v1386 = vsel %vm1377, %v1330, 0
        %v1388 = vsel %vm1377, %v1332, 0
        %v1390 = vsel %vm1377, %v1334, 0
        %v1392 = vsel %vm1377, %v1336, 0
        %v1394 = vsel %vm1377, %v1338, 0
        %v1396 = vsel %vm1377, %v1340, 0
        %v1398 = vsel %vm1377, %v1342, 0
        %v1400 = vsel %vm1377, %v1344, 0
        %v1402 = vsel %vm1377, %v1346, 0
        %v1404 = vsel %vm1377, %v1348, 0
        %v1406 = vsel %vm1377, %v1350, 0
        %v1408 = vsel %vm1377, %v1352, 0
        %vm1410 = vcmask 1041408
        %v1412 = vsel %vm1410, %v1374, 0
        %1414 = vmatpush.bf16.msra.mxu0 0
        %1415 = vmatpush.bf16.msra.mxu0 0
        %1416 = vmatpush.bf16.msra.mxu0 0
        %1417 = vmatpush.bf16.msra.mxu0 0
        %1418 = vmatpush.bf16.msra.mxu0 0
        %1419 = vmatpush.bf16.msra.mxu0 %v1412
        %1420 = vmatpush.bf16.msra.mxu0 %v1373
        %1421 = vmatpush.bf16.msra.mxu0 %v1372
        %1422 = vmatmul.bf16.gmra.mxu0 %v1378
        %v1423 = vpop.f32.mrf.mxu0
        %v1424 = vadd.f32 %v1360, %v1423
        %v1425 = vpop.f32.mrf.mxu0
        %v1426 = vadd.f32 %v1360, %v1425
        %1427 = vmatmul.bf16.gmra.mxu0 %v1380
        %v1428 = vpop.f32.mrf.mxu0
        %v1429 = vadd.f32 %v1360, %v1428
        %v1430 = vpop.f32.mrf.mxu0
        %v1431 = vadd.f32 %v1360, %v1430
        %1432 = vmatmul.bf16.gmra.mxu0 %v1382
        %v1433 = vpop.f32.mrf.mxu0
        %v1434 = vadd.f32 %v1360, %v1433
        %v1435 = vpop.f32.mrf.mxu0
        %v1436 = vadd.f32 %v1360, %v1435
        %1437 = vmatmul.bf16.gmra.mxu0 %v1384
        %v1438 = vpop.f32.mrf.mxu0
        %v1439 = vadd.f32 %v1360, %v1438
        %v1440 = vpop.f32.mrf.mxu0
        %v1441 = vadd.f32 %v1360, %v1440
        %1442 = vmatmul.bf16.gmra.mxu0 %v1386
        %v1443 = vpop.f32.mrf.mxu0
        %v1444 = vadd.f32 %v1360, %v1443
        %v1445 = vpop.f32.mrf.mxu0
        %v1446 = vadd.f32 %v1360, %v1445
        %1447 = vmatmul.bf16.gmra.mxu0 %v1388
        %v1448 = vpop.f32.mrf.mxu0
        %v1449 = vadd.f32 %v1360, %v1448
        %v1450 = vpop.f32.mrf.mxu0
        %v1451 = vadd.f32 %v1360, %v1450
        %1452 = vmatmul.bf16.gmra.mxu0 %v1390
        %v1453 = vpop.f32.mrf.mxu0
        %v1454 = vadd.f32 %v1360, %v1453
        %v1455 = vpop.f32.mrf.mxu0
        %v1456 = vadd.f32 %v1360, %v1455
        %1457 = vmatmul.bf16.gmra.mxu0 %v1392
        %v1458 = vpop.f32.mrf.mxu0
        %v1459 = vadd.f32 %v1360, %v1458
        %v1460 = vpop.f32.mrf.mxu0
        %v1461 = vadd.f32 %v1360, %v1460
        %1462 = vmatmul.bf16.gmra.mxu0 %v1394
        %v1463 = vpop.f32.mrf.mxu0
        %v1464 = vadd.f32 %v1360, %v1463
        %v1465 = vpop.f32.mrf.mxu0
        %v1466 = vadd.f32 %v1360, %v1465
        %1467 = vmatmul.bf16.gmra.mxu0 %v1396
        %v1468 = vpop.f32.mrf.mxu0
        %v1469 = vadd.f32 %v1360, %v1468
        %v1470 = vpop.f32.mrf.mxu0
        %v1471 = vadd.f32 %v1360, %v1470
        %1472 = vmatmul.bf16.gmra.mxu0 %v1398
        %v1473 = vpop.f32.mrf.mxu0
        %v1474 = vadd.f32 %v1360, %v1473
        %v1475 = vpop.f32.mrf.mxu0
        %v1476 = vadd.f32 %v1360, %v1475
        %1477 = vmatmul.bf16.gmra.mxu0 %v1400
        %v1478 = vpop.f32.mrf.mxu0
        %v1479 = vadd.f32 %v1360, %v1478
        %v1480 = vpop.f32.mrf.mxu0
        %v1481 = vadd.f32 %v1360, %v1480
        %1482 = vmatmul.bf16.gmra.mxu0 %v1402
        %v1483 = vpop.f32.mrf.mxu0
        %v1484 = vadd.f32 %v1360, %v1483
        %v1485 = vpop.f32.mrf.mxu0
        %v1486 = vadd.f32 %v1360, %v1485
        %1487 = vmatmul.bf16.gmra.mxu0 %v1404
        %v1488 = vpop.f32.mrf.mxu0
        %v1489 = vadd.f32 %v1360, %v1488
        %v1490 = vpop.f32.mrf.mxu0
        %v1491 = vadd.f32 %v1360, %v1490
        %1492 = vmatmul.bf16.gmra.mxu0 %v1406
        %v1493 = vpop.f32.mrf.mxu0
        %v1494 = vadd.f32 %v1360, %v1493
        %v1495 = vpop.f32.mrf.mxu0
        %v1496 = vadd.f32 %v1360, %v1495
        %1497 = vmatmul.bf16.gmra.mxu0 %v1408
        %v1498 = vpop.f32.mrf.mxu0
        %v1499 = vadd.f32 %v1360, %v1498
        %v1500 = vpop.f32.mrf.mxu0
        %v1501 = vadd.f32 %v1360, %v1500
        %1502 = vdwg.mxu0
        %v1503 = vsel %vm1122, %v1424, 0.0
        %v1504 = vsel %vm1122, %v1426, 0.0
        %v1505 = vadd.f32 %v1503, %v1504
        %v1506 = vsel %vm1122, %v1429, 0.0
        %v1507 = vadd.f32 %v1505, %v1506
        %v1508 = vsel %vm1122, %v1431, 0.0
        %v1509 = vadd.f32 %v1507, %v1508
        %v1510 = vsel %vm1122, %v1434, 0.0
        %v1511 = vadd.f32 %v1509, %v1510
        %v1512 = vsel %vm1122, %v1436, 0.0
        %v1513 = vadd.f32 %v1511, %v1512
        %v1514 = vsel %vm1122, %v1439, 0.0
        %v1515 = vadd.f32 %v1513, %v1514
        %v1516 = vsel %vm1122, %v1441, 0.0
        %v1517 = vadd.f32 %v1515, %v1516
        %v1518 = vsel %vm1122, %v1444, 0.0
        %v1519 = vadd.f32 %v1517, %v1518
        %v1520 = vsel %vm1122, %v1446, 0.0
        %v1521 = vadd.f32 %v1519, %v1520
        %v1522 = vsel %vm1122, %v1449, 0.0
        %v1523 = vadd.f32 %v1521, %v1522
        %v1524 = vsel %vm1122, %v1451, 0.0
        %v1525 = vadd.f32 %v1523, %v1524
        %v1526 = vsel %vm1122, %v1454, 0.0
        %v1527 = vadd.f32 %v1525, %v1526
        %v1528 = vsel %vm1122, %v1456, 0.0
        %v1529 = vadd.f32 %v1527, %v1528
        %v1530 = vsel %vm1122, %v1459, 0.0
        %v1531 = vadd.f32 %v1529, %v1530
        %v1532 = vsel %vm1122, %v1461, 0.0
        %v1533 = vadd.f32 %v1531, %v1532
        %v1534 = vsel %vm1122, %v1464, 0.0
        %v1535 = vadd.f32 %v1533, %v1534
        %v1536 = vsel %vm1122, %v1466, 0.0
        %v1537 = vadd.f32 %v1535, %v1536
        %v1538 = vsel %vm1122, %v1469, 0.0
        %v1539 = vadd.f32 %v1537, %v1538
        %v1540 = vsel %vm1122, %v1471, 0.0
        %v1541 = vadd.f32 %v1539, %v1540
        %v1542 = vsel %vm1122, %v1474, 0.0
        %v1543 = vadd.f32 %v1541, %v1542
        %v1544 = vsel %vm1122, %v1476, 0.0
        %v1545 = vadd.f32 %v1543, %v1544
        %v1546 = vsel %vm1122, %v1479, 0.0
        %v1547 = vadd.f32 %v1545, %v1546
        %v1548 = vsel %vm1122, %v1481, 0.0
        %v1549 = vadd.f32 %v1547, %v1548
        %v1550 = vsel %vm1122, %v1484, 0.0
        %v1551 = vadd.f32 %v1549, %v1550
        %v1552 = vsel %vm1122, %v1486, 0.0
        %v1553 = vadd.f32 %v1551, %v1552
        %v1554 = vsel %vm1122, %v1489, 0.0
        %v1555 = vadd.f32 %v1553, %v1554
        %v1556 = vsel %vm1122, %v1491, 0.0
        %v1557 = vadd.f32 %v1555, %v1556
        %v1558 = vsel %vm1122, %v1494, 0.0
        %v1559 = vadd.f32 %v1557, %v1558
        %v1560 = vsel %vm1122, %v1496, 0.0
        %v1561 = vadd.f32 %v1559, %v1560
        %v1562 = vsel %vm1122, %v1499, 0.0
        %v1563 = vadd.f32 %v1561, %v1562
        %v1564 = vsel %vm1122, %v1501, 0.0
        %v1565 = vadd.f32 %v1563, %v1564
        %v1566 = vrot.slane %v1565, 4
        %v1567 = vadd.f32 %v1565, %v1566
        %v1568 = vrot.slane %v1567, 2
        %v1569 = vadd.f32 %v1567, %v1568
        %v1570 = vrot.slane %v1569, 1
        %v1571 = vadd.f32 %v1569, %v1570
        %vm1572 = vcmask 57344
        %1573 = vst.msk [vmem:[%s227] sm:$0x1] %vm1572, %v1571
        %v1574 = vmul.f32 %v1424, %v1424
        %v1575 = vmul.f32 %v1426, %v1426
        %v1576 = vmul.f32 %v1429, %v1429
        %v1577 = vmul.f32 %v1431, %v1431
        %v1578 = vmul.f32 %v1434, %v1434
        %v1579 = vmul.f32 %v1436, %v1436
        %v1580 = vmul.f32 %v1439, %v1439
        %v1581 = vmul.f32 %v1441, %v1441
        %v1582 = vmul.f32 %v1444, %v1444
        %v1583 = vmul.f32 %v1446, %v1446
        %v1584 = vmul.f32 %v1449, %v1449
        %v1585 = vmul.f32 %v1451, %v1451
        %v1586 = vmul.f32 %v1454, %v1454
        %v1587 = vmul.f32 %v1456, %v1456
        %v1588 = vmul.f32 %v1459, %v1459
        %v1589 = vmul.f32 %v1461, %v1461
        %v1590 = vmul.f32 %v1464, %v1464
        %v1591 = vmul.f32 %v1466, %v1466
        %v1592 = vmul.f32 %v1469, %v1469
        %v1593 = vmul.f32 %v1471, %v1471
        %v1594 = vmul.f32 %v1474, %v1474
        %v1595 = vmul.f32 %v1476, %v1476
        %v1596 = vmul.f32 %v1479, %v1479
        %v1597 = vmul.f32 %v1481, %v1481
        %v1598 = vmul.f32 %v1484, %v1484
        %v1599 = vmul.f32 %v1486, %v1486
        %v1600 = vmul.f32 %v1489, %v1489
        %v1601 = vmul.f32 %v1491, %v1491
        %v1602 = vmul.f32 %v1494, %v1494
        %v1603 = vmul.f32 %v1496, %v1496
        %v1604 = vmul.f32 %v1499, %v1499
        %v1605 = vmul.f32 %v1501, %v1501
        %v1606 = vsel %vm1122, %v1574, 0.0
        %v1607 = vsel %vm1122, %v1575, 0.0
        %v1608 = vadd.f32 %v1606, %v1607
        %v1609 = vsel %vm1122, %v1576, 0.0
        %v1610 = vadd.f32 %v1608, %v1609
        %v1611 = vsel %vm1122, %v1577, 0.0
        %v1612 = vadd.f32 %v1610, %v1611
        %v1613 = vsel %vm1122, %v1578, 0.0
        %v1614 = vadd.f32 %v1612, %v1613
        %v1615 = vsel %vm1122, %v1579, 0.0
        %v1616 = vadd.f32 %v1614, %v1615
        %v1617 = vsel %vm1122, %v1580, 0.0
        %v1618 = vadd.f32 %v1616, %v1617
        %v1619 = vsel %vm1122, %v1581, 0.0
        %v1620 = vadd.f32 %v1618, %v1619
        %v1621 = vsel %vm1122, %v1582, 0.0
        %v1622 = vadd.f32 %v1620, %v1621
        %v1623 = vsel %vm1122, %v1583, 0.0
        %v1624 = vadd.f32 %v1622, %v1623
        %v1625 = vsel %vm1122, %v1584, 0.0
        %v1626 = vadd.f32 %v1624, %v1625
        %v1627 = vsel %vm1122, %v1585, 0.0
        %v1628 = vadd.f32 %v1626, %v1627
        %v1629 = vsel %vm1122, %v1586, 0.0
        %v1630 = vadd.f32 %v1628, %v1629
        %v1631 = vsel %vm1122, %v1587, 0.0
        %v1632 = vadd.f32 %v1630, %v1631
        %v1633 = vsel %vm1122, %v1588, 0.0
        %v1634 = vadd.f32 %v1632, %v1633
        %v1635 = vsel %vm1122, %v1589, 0.0
        %v1636 = vadd.f32 %v1634, %v1635
        %v1637 = vsel %vm1122, %v1590, 0.0
        %v1638 = vadd.f32 %v1636, %v1637
        %v1639 = vsel %vm1122, %v1591, 0.0
        %v1640 = vadd.f32 %v1638, %v1639
        %v1641 = vsel %vm1122, %v1592, 0.0
        %v1642 = vadd.f32 %v1640, %v1641
        %v1643 = vsel %vm1122, %v1593, 0.0
        %v1644 = vadd.f32 %v1642, %v1643
        %v1645 = vsel %vm1122, %v1594, 0.0
        %v1646 = vadd.f32 %v1644, %v1645
        %v1647 = vsel %vm1122, %v1595, 0.0
        %v1648 = vadd.f32 %v1646, %v1647
        %v1649 = vsel %vm1122, %v1596, 0.0
        %v1650 = vadd.f32 %v1648, %v1649
        %v1651 = vsel %vm1122, %v1597, 0.0
        %v1652 = vadd.f32 %v1650, %v1651
        %v1653 = vsel %vm1122, %v1598, 0.0
        %v1654 = vadd.f32 %v1652, %v1653
        %v1655 = vsel %vm1122, %v1599, 0.0
        %v1656 = vadd.f32 %v1654, %v1655
        %v1657 = vsel %vm1122, %v1600, 0.0
        %v1658 = vadd.f32 %v1656, %v1657
        %v1659 = vsel %vm1122, %v1601, 0.0
        %v1660 = vadd.f32 %v1658, %v1659
        %v1661 = vsel %vm1122, %v1602, 0.0
        %v1662 = vadd.f32 %v1660, %v1661
        %v1663 = vsel %vm1122, %v1603, 0.0
        %v1664 = vadd.f32 %v1662, %v1663
        %v1665 = vsel %vm1122, %v1604, 0.0
        %v1666 = vadd.f32 %v1664, %v1665
        %v1667 = vsel %vm1122, %v1605, 0.0
        %v1668 = vadd.f32 %v1666, %v1667
        %v1669 = vrot.slane %v1668, 4
        %v1670 = vadd.f32 %v1668, %v1669
        %v1671 = vrot.slane %v1670, 2
        %v1672 = vadd.f32 %v1670, %v1671
        %v1673 = vrot.slane %v1672, 1
        %v1674 = vadd.f32 %v1672, %v1673
        %1675 = vst.msk [vmem:[%s233] sm:$0x1] %vm1572, %v1674
        %1676 = vxpose.xlu0.b32.start [1/16] %v1424, 128
        %1677 = vxpose.xlu0.b32.cont [2/16] %v1426, 128
        %1678 = vxpose.xlu0.b32.cont [3/16] %v1429, 128
        %1679 = vxpose.xlu0.b32.cont [4/16] %v1431, 128
        %1680 = vxpose.xlu0.b32.cont [5/16] %v1434, 128
        %1681 = vxpose.xlu0.b32.cont [6/16] %v1436, 128
        %1682 = vxpose.xlu0.b32.cont [7/16] %v1439, 128
        %1683 = vxpose.xlu0.b32.cont [8/16] %v1441, 128
        %1684 = vxpose.xlu0.b32.cont [9/16] %v1444, 128
        %1685 = vxpose.xlu0.b32.cont [10/16] %v1446, 128
        %1686 = vxpose.xlu0.b32.cont [11/16] %v1449, 128
        %1687 = vxpose.xlu0.b32.cont [12/16] %v1451, 128
        %1688 = vxpose.xlu0.b32.cont [13/16] %v1454, 128
        %1689 = vxpose.xlu0.b32.cont [14/16] %v1456, 128
        %1690 = vxpose.xlu0.b32.cont [15/16] %v1459, 128
        %1691 = vxpose.xlu0.b32.end [16/16] %v1461, 128
        %v1692 = vpop.trf.xlu0
        %v1693 = vpop.trf.xlu0
        %v1694 = vpop.trf.xlu0
        %v1695 = vpop.trf.xlu0
        %v1696 = vpop.trf.xlu0
        %v1697 = vpop.trf.xlu0
        %v1698 = vpop.trf.xlu0
        %v1699 = vpop.trf.xlu0
        %v1700 = vpop.trf.xlu0
        %v1701 = vpop.trf.xlu0
        %v1702 = vpop.trf.xlu0
        %v1703 = vpop.trf.xlu0
        %v1704 = vpop.trf.xlu0
        %v1705 = vpop.trf.xlu0
        %v1706 = vpop.trf.xlu0
        %v1707 = vpop.trf.xlu0
        %1708 = vxpose.xlu0.b32.start [1/16] %v1464, 128
        %1709 = vxpose.xlu0.b32.cont [2/16] %v1466, 128
        %1710 = vxpose.xlu0.b32.cont [3/16] %v1469, 128
        %1711 = vxpose.xlu0.b32.cont [4/16] %v1471, 128
        %1712 = vxpose.xlu0.b32.cont [5/16] %v1474, 128
        %1713 = vxpose.xlu0.b32.cont [6/16] %v1476, 128
        %1714 = vxpose.xlu0.b32.cont [7/16] %v1479, 128
        %1715 = vxpose.xlu0.b32.cont [8/16] %v1481, 128
        %1716 = vxpose.xlu0.b32.cont [9/16] %v1484, 128
        %1717 = vxpose.xlu0.b32.cont [10/16] %v1486, 128
        %1718 = vxpose.xlu0.b32.cont [11/16] %v1489, 128
        %1719 = vxpose.xlu0.b32.cont [12/16] %v1491, 128
        %1720 = vxpose.xlu0.b32.cont [13/16] %v1494, 128
        %1721 = vxpose.xlu0.b32.cont [14/16] %v1496, 128
        %1722 = vxpose.xlu0.b32.cont [15/16] %v1499, 128
        %1723 = vxpose.xlu0.b32.end [16/16] %v1501, 128
        %v1724 = vpop.trf.xlu0
        %v1725 = vpop.trf.xlu0
        %v1726 = vpop.trf.xlu0
        %v1727 = vpop.trf.xlu0
        %v1728 = vpop.trf.xlu0
        %v1729 = vpop.trf.xlu0
        %v1730 = vpop.trf.xlu0
        %v1731 = vpop.trf.xlu0
        %v1732 = vpop.trf.xlu0
        %v1733 = vpop.trf.xlu0
        %v1734 = vpop.trf.xlu0
        %v1735 = vpop.trf.xlu0
        %v1736 = vpop.trf.xlu0
        %v1737 = vpop.trf.xlu0
        %v1738 = vpop.trf.xlu0
        %v1739 = vpop.trf.xlu0
        %v1740 = vpack.c.bf16 %v1724, %v1692
        %1741 = vst [vmem:[%s221] sm:$0xff] %v1740
        %s1742 = sand.u32 %s99, 1
        %s1743 = scalar_lea.sflag [#allocation3], %s1742
        %s1744 = sand.u32 %s99, 1
        %s1745 = smul.addr %s1744, 8
        %s1746 = scalar_lea.vmem [#allocation2], %s1745
        %s1747 = sand.u32 %s23, 1
        %s1748 = scalar_lea.sflag [#allocation5], %s1747
        %s1749 = sand.u32 %s125, 1
        %s1750 = scalar_lea.vmem [#allocation4], %s1749
        %s1751 = sand.u32 %s23, 1
        %s1752 = scalar_lea.sflag [#allocation5], %s1751
        %s1753 = sand.u32 %s151, 1
        %s1754 = scalar_lea.vmem [#allocation6], %s1753
        // Predicated region
        $region33: #{tpu_custom_call.1} parent=31 // pred_check
          %p1755 = pneg %p109
        $region34: #{tpu_custom_call.1} parent=31 // pred_check_branch
          %1757 = sbr.rel (%p1755) target = $region36
        $region35: #{tpu_custom_call.1} parent=31 // pred_region
          %1759 = vsyncadd %s1743, 0
          %s1760 = smul.addr %s23, 2
          %s1761 = smul.addr %s1760, 4
          %s1762 = scalar_lea.hbm %s3, %s1761
          %s1764 = sshll.u32 %s1746, 4
          %s1765 = int_to_ptr.vmem [resolvable:$true] %s1764
          %s1766 = sshll.u32 %s1762, 4
          %s1767 = int_to_ptr.hbm [resolvable:$true] %s1766
          %1769 = dma.vmem_to_hbm [thread:$0]  %s1765, 128, %s1767, %s1743
        $region36: #{tpu_custom_call.1} parent=31 // pred_fallthru
          _
        // Predicated region
        $region37: #{tpu_custom_call.1} parent=31 // pred_check
          %p1770 = pneg %p135
        $region38: #{tpu_custom_call.1} parent=31 // pred_check_branch
          %1772 = sbr.rel (%p1770) target = $region40
        $region39: #{tpu_custom_call.1} parent=31 // pred_region
          %1774 = vsyncadd %s1748, 0
          %s1775 = scalar_lea.hbm %s4, %s23
          %s1777 = sshll.u32 %s1750, 4
          %s1778 = int_to_ptr.vmem [resolvable:$true] %s1777
          %s1779 = sshll.u32 %s1775, 4
          %s1780 = int_to_ptr.hbm [resolvable:$true] %s1779
          %1782 = dma.vmem_to_hbm [thread:$0]  %s1778, 16, %s1780, %s1748
        $region40: #{tpu_custom_call.1} parent=31 // pred_fallthru
          _
        // Predicated region
        $region41: #{tpu_custom_call.1} parent=31 // pred_check
          %p1783 = pneg %p161
        $region42: #{tpu_custom_call.1} parent=31 // pred_check_branch
          %1785 = sbr.rel (%p1783) target = $region44
        $region43: #{tpu_custom_call.1} parent=31 // pred_region
          %1787 = vsyncadd %s1752, 0
          %s1788 = scalar_lea.hbm %s5, %s23
          %s1790 = sshll.u32 %s1754, 4
          %s1791 = int_to_ptr.vmem [resolvable:$true] %s1790
          %s1792 = sshll.u32 %s1788, 4
          %s1793 = int_to_ptr.hbm [resolvable:$true] %s1792
          %1795 = dma.vmem_to_hbm [thread:$0]  %s1791, 16, %s1793, %s1752
        $region44: #{tpu_custom_call.1} parent=31 // pred_fallthru
          _
      $region32: #{tpu_custom_call.1} parent=5 // pred_fallthru
        _
      %p1796 = scmp.le.s32.totalorder 2, %s18
      // Predicated region
      $region45: #{tpu_custom_call.1} parent=5 // pred_check
        %p1797 = pneg %p1796
      $region46: #{tpu_custom_call.1} parent=5 // pred_check_branch
        %1799 = sbr.rel (%p1797) target = $region48
      $region47: #{tpu_custom_call.1} parent=5 // pred_region
        %s1800 = ssub.s32 %s18, 2
        // Predicated region
        $region49: #{tpu_custom_call.1} parent=47 // pred_check
          %p1801 = pneg %p115
        $region50: #{tpu_custom_call.1} parent=47 // pred_check_branch
          %1803 = sbr.rel (%p1801) target = $region52
        $region51: #{tpu_custom_call.1} parent=47 // pred_region
          %s1804 = sand.u32 %s100, 1
          %s1805 = scalar_lea.sflag [#allocation3], %s1804
          %s1806 = sand.u32 %s100, 1
          %s1807 = smul.addr %s1806, 8
          %s1808 = scalar_lea.vmem [#allocation2], %s1807
          %1810 = dma.done %s1805, 128
        $region52: #{tpu_custom_call.1} parent=47 // pred_fallthru
          _
        // Predicated region
        $region53: #{tpu_custom_call.1} parent=47 // pred_check
          %p1811 = pneg %p141
        $region54: #{tpu_custom_call.1} parent=47 // pred_check_branch
          %1813 = sbr.rel (%p1811) target = $region56
        $region55: #{tpu_custom_call.1} parent=47 // pred_region
          %s1814 = sand.u32 %s24, 1
          %s1815 = scalar_lea.sflag [#allocation5], %s1814
          %s1816 = sand.u32 %s126, 1
          %s1817 = scalar_lea.vmem [#allocation4], %s1816
          %1819 = dma.done %s1815, 16
        $region56: #{tpu_custom_call.1} parent=47 // pred_fallthru
          _
        // Predicated region
        $region57: #{tpu_custom_call.1} parent=47 // pred_check
          %p1820 = pneg %p167
        $region58: #{tpu_custom_call.1} parent=47 // pred_check_branch
          %1822 = sbr.rel (%p1820) target = $region60
        $region59: #{tpu_custom_call.1} parent=47 // pred_region
          %s1823 = sand.u32 %s24, 1
          %s1824 = scalar_lea.sflag [#allocation5], %s1823
          %s1825 = sand.u32 %s152, 1
          %s1826 = scalar_lea.vmem [#allocation6], %s1825
          %1828 = dma.done %s1824, 16
        $region60: #{tpu_custom_call.1} parent=47 // pred_fallthru
          _
      $region48: #{tpu_custom_call.1} parent=5 // pred_fallthru
        _
    $region6: #{tpu_custom_call.1} parent=1 // loop_footer
      %s22 = sadd.s32 1, %s18
    $region7: #{tpu_custom_call.1} parent=1 // loop_footer_branch
      %17 = sbr.rel target = $region3
    $region8: #{tpu_custom_call.1} parent=1 // loop_exit
      _
    %1829 = vsyncpa [#allocation3], 1
    %s1830 = scalar_lea.sflag [#allocation3], 1
    %1831 = vsyncpa %s1830, 1
    %1832 = vsyncpa [#allocation5], 1
    %s1833 = scalar_lea.sflag [#allocation5], 1
    %1834 = vsyncpa %s1833, 1

</llo_original>
